<compile_context>
chip_gen: v7x
topology: tpu7x:2x2x1
jax: 0.10.0
libtpu: 0.0.40
codegen_flags: <defaults>
</compile_context>

<pallas_src>
import math

import jax
import jax.numpy as jnp
from jax.experimental import pallas as pl
from jax.experimental.pallas import tpu as pltpu


_VMEM = pl.BlockSpec(memory_space=pltpu.MemorySpace.VMEM)


# ----------------------------------------------------------------------------
# Fused Pallas kernel: attention + 3 LSTM cells + output linear (one step)
# ----------------------------------------------------------------------------
def _lstm_gates(gates, c_prev, H):
    """PyTorch gate order i, f, g, o."""
    i = jax.nn.sigmoid(gates[:, 0:H])
    f = jax.nn.sigmoid(gates[:, H:2 * H])
    g = jnp.tanh(gates[:, 2 * H:3 * H])
    o = jax.nn.sigmoid(gates[:, 3 * H:4 * H])
    c_new = f * c_prev + i * g
    return o * jnp.tanh(c_new), c_new


def _attn_decoder_kernel(
        x_ref, h_ref, c_ref, enc_ref,
        wah_ref, wae_ref, battn_ref, v_ref,
        w0x_ref, w0w_ref, w0h_ref, b0_ref,
        w1i_ref, w1h_ref, b1_ref,
        w2i_ref, w2h_ref, b2_ref,
        wo1_ref, wo2_ref, bo_ref,
        xout_ref, hout_ref, cout_ref):
    B, S, H = enc_ref.shape
    F = x_ref.shape[-1]

    enc = enc_ref[...]                                   # (B, S, H)
    h_top = h_ref[2]                                     # (B, H) last-layer hidden

    # ---- attention: energy = tanh([hidden, enc] @ Wa^T + b); softmax over S ----
    # hidden projection computed once and broadcast over src_len.
    hid_proj = jnp.dot(h_top, wah_ref[...], preferred_element_type=jnp.float32)   # (B, H)
    enc_proj = jnp.dot(enc.reshape(B * S, H), wae_ref[...],
                       preferred_element_type=jnp.float32).reshape(B, S, H)
    energy = jnp.tanh(enc_proj + hid_proj.reshape(B, 1, H)
                      + battn_ref[...].reshape(1, 1, H))                           # (B, S, H)
    score = jnp.sum(energy * v_ref[...].reshape(1, 1, H), axis=-1)                 # (B, S)
    m = jnp.max(score, axis=-1, keepdims=True)
    e = jnp.exp(score - m)
    attn = e * pl.reciprocal(jnp.sum(e, axis=-1, keepdims=True), approx=True)      # softmax
    # weighted = bmm(a.unsqueeze(1), enc).squeeze(1)
    weighted = jnp.sum(attn.reshape(B, S, 1) * enc, axis=1)                        # (B, H)

    # ---- LSTM layer 0: input = [x (F), weighted (H)] ----
    gates0 = (jnp.dot(weighted, w0w_ref[...], preferred_element_type=jnp.float32)
              + jnp.dot(h_ref[0], w0h_ref[...], preferred_element_type=jnp.float32)
              + b0_ref[...])
    # x contribution as rank-1 broadcast updates (F is tiny; avoids a K=F matmul).
    for f in range(F):
        gates0 = gates0 + x_ref[:, f:f + 1] * w0x_ref[f:f + 1, :]
    h0, c0 = _lstm_gates(gates0, c_ref[0], H)

    # ---- LSTM layer 1 ----
    gates1 = (jnp.dot(h0, w1i_ref[...], preferred_element_type=jnp.float32)
              + jnp.dot(h_ref[1], w1h_ref[...], preferred_element_type=jnp.float32)
              + b1_ref[...])
    h1, c1 = _lstm_gates(gates1, c_ref[1], H)

    # ---- LSTM layer 2 ----
    gates2 = (jnp.dot(h1, w2i_ref[...], preferred_element_type=jnp.float32)
              + jnp.dot(h_top, w2h_ref[...], preferred_element_type=jnp.float32)
              + b2_ref[...])
    h2, c2 = _lstm_gates(gates2, c_ref[2], H)

    # ---- output Linear(2H -> F) on cat([output, weighted]) ----
    xout_ref[...] = (jnp.dot(h2, wo1_ref[...], preferred_element_type=jnp.float32)
                     + jnp.dot(weighted, wo2_ref[...], preferred_element_type=jnp.float32)
                     + bo_ref[...])

    hout_ref[0] = h0
    hout_ref[1] = h1
    hout_ref[2] = h2
    cout_ref[0] = c0
    cout_ref[1] = c1
    cout_ref[2] = c2


def attention_decoder_forward(params, x, hidden, cell, enc_out):
    """x: (B, F) or (B, 1, F); hidden/cell: (3, B, H); enc_out: (B, S, H).
    Returns (x_out (B, F), hidden_n (3, B, H), cell_n (3, B, H))."""
    B, S, H = enc_out.shape
    p = params
    F = p["w0x"].shape[0]
    x = x.reshape(-1, F)

    inputs = (x, hidden, cell, enc_out,
              p["wah"], p["wae"], p["battn"], p["v"],
              p["w0x"], p["w0w"], p["w0h"], p["b0"],
              p["w1i"], p["w1h"], p["b1"],
              p["w2i"], p["w2h"], p["b2"],
              p["wo1"], p["wo2"], p["bo"])

    return pl.pallas_call(
        _attn_decoder_kernel,
        out_shape=(jax.ShapeDtypeStruct((B, F), jnp.float32),
                   jax.ShapeDtypeStruct((3, B, H), jnp.float32),
                   jax.ShapeDtypeStruct((3, B, H), jnp.float32)),
        in_specs=[_VMEM] * len(inputs),
        out_specs=(_VMEM, _VMEM, _VMEM),
    )(*inputs)


# ----------------------------------------------------------------------------
# Deterministic parameter init (PyTorch shapes / init ranges), pre-transposed
# ----------------------------------------------------------------------------
def _uniform(key, shape, scale):
    return jax.random.uniform(key, shape, jnp.float32, -scale, scale)


def init_params(key, n_features, hidden_dim):
    F, H = n_features, hidden_dim
    nxt = iter(jax.random.split(key, 17)).__next__
    s = 1.0 / math.sqrt(H)

    def lstm_layer(in_sz):
        wih = _uniform(nxt(), (4 * H, in_sz), s)          # PyTorch (4H, in)
        whh = _uniform(nxt(), (4 * H, H), s)
        b = _uniform(nxt(), (4 * H,), s) + _uniform(nxt(), (4 * H,), s)
        return wih, whh, b.reshape(1, 4 * H)

    wih0, whh0, b0 = lstm_layer(H + F)   # layer 0 input = cat([x (F), weighted (H)])
    wih1, whh1, b1 = lstm_layer(H)
    wih2, whh2, b2 = lstm_layer(H)

    sa = 1.0 / math.sqrt(2 * H)
    attn_w = _uniform(nxt(), (H, 2 * H), sa)              # Linear(2H, H).weight
    attn_b = _uniform(nxt(), (H,), sa)
    v_w = _uniform(nxt(), (1, H), 1.0 / math.sqrt(H))     # Linear(H, 1, bias=False)

    so = 1.0 / math.sqrt(2 * H)
    out_w = _uniform(nxt(), (F, 2 * H), so)               # Linear(2H, F).weight
    out_b = _uniform(nxt(), (F,), so)

    return {
        # attention: cat order (hidden, encoder_outputs)
        "wah": attn_w[:, :H].T, "wae": attn_w[:, H:].T,
        "battn": attn_b.reshape(1, H), "v": v_w,
        # LSTM layer 0: weight_ih split per [x, weighted] operand, pre-transposed
        "w0x": wih0[:, :F].T, "w0w": wih0[:, F:].T, "w0h": whh0.T, "b0": b0,
        "w1i": wih1.T, "w1h": whh1.T, "b1": b1,
        "w2i": wih2.T, "w2h": whh2.T, "b2": b2,
        # output Linear split per (output, weighted) cat operand
        "wo1": out_w[:, :H].T, "wo2": out_w[:, H:].T, "bo": out_b.reshape(1, F),
    }


# ----------------------------------------------------------------------------
# Pure-JAX reference (same math, plain XLA) for a correctness check
# ----------------------------------------------------------------------------
def reference_forward(p, x, hidden, cell, enc):
    B, S, H = enc.shape
    F = p["w0x"].shape[0]
    x = x.reshape(-1, F)
    h_top = hidden[2]

    hid_proj = h_top @ p["wah"]
    enc_proj = jnp.einsum("bsh,hk->bsk", enc, p["wae"])
    energy = jnp.tanh(enc_proj + hid_proj[:, None, :] + p["battn"].reshape(1, 1, H))
    score = jnp.sum(energy * p["v"].reshape(1, 1, H), axis=-1)
    a = jax.nn.softmax(score, axis=-1)
    weighted = jnp.einsum("bs,bsh->bh", a, enc)

    def lstm(gates, c_prev):
        i = jax.nn.sigmoid(gates[:, :H])
        f = jax.nn.sigmoid(gates[:, H:2 * H])
        g = jnp.tanh(gates[:, 2 * H:3 * H])
        o = jax.nn.sigmoid(gates[:, 3 * H:])
        c = f * c_prev + i * g
        return o * jnp.tanh(c), c

    g0 = x @ p["w0x"] + weighted @ p["w0w"] + hidden[0] @ p["w0h"] + p["b0"]
    h0, c0 = lstm(g0, cell[0])
    g1 = h0 @ p["w1i"] + hidden[1] @ p["w1h"] + p["b1"]
    h1, c1 = lstm(g1, cell[1])
    g2 = h1 @ p["w2i"] + hidden[2] @ p["w2h"] + p["b2"]
    h2, c2 = lstm(g2, cell[2])
    out = h2 @ p["wo1"] + weighted @ p["wo2"] + p["bo"]
    return out, jnp.stack([h0, h1, h2]), jnp.stack([c0, c1, c2])


# ----------------------------------------------------------------------------
if __name__ == "__main__":
    B, S, F, H = 2, 8, 1, 32      # batch, src seq_len, n_features, hidden_dim

    key = jax.random.PRNGKey(0)
    kp, kx, kh, kc, ke = jax.random.split(key, 5)

    params = init_params(kp, F, H)
    x = jax.random.normal(kx, (B, F), jnp.float32)
    hidden = jax.random.normal(kh, (3, B, H), jnp.float32)
    cell = jax.random.normal(kc, (3, B, H), jnp.float32)
    enc_out = jax.random.normal(ke, (B, S, H), jnp.float32)

    fwd = jax.jit(attention_decoder_forward)
    x_out, h_n, c_n = fwd(params, x, hidden, cell, enc_out)
    (x_out, h_n, c_n) = jax.block_until_ready((x_out, h_n, c_n))

    assert x_out.shape == (B, F), x_out.shape
    assert h_n.shape == (3, B, H) and c_n.shape == (3, B, H)
    assert bool(jnp.all(jnp.isfinite(x_out)))
    assert bool(jnp.all(jnp.isfinite(h_n)))
    assert bool(jnp.all(jnp.isfinite(c_n)))

    with jax.default_matmul_precision("float32"):
        r_out, r_h, r_c = reference_forward(params, x, hidden, cell, enc_out)
    assert bool(jnp.allclose(x_out, r_out, rtol=1e-2, atol=1e-2))
    assert bool(jnp.allclose(h_n, r_h, rtol=1e-2, atol=1e-2))
    assert bool(jnp.allclose(c_n, r_c, rtol=1e-2, atol=1e-2))

    print("KERNEL_OK")
</pallas_src>

<mosaic_0001>
module attributes {stable_mosaic.version = 11 : i64} {
  func.func @_attn_decoder_kernel(%arg0: memref<2x1xf32, #tpu.memory_space<vmem>>, %arg1: memref<3x2x32xf32, #tpu.memory_space<vmem>>, %arg2: memref<3x2x32xf32, #tpu.memory_space<vmem>>, %arg3: memref<2x8x32xf32, #tpu.memory_space<vmem>>, %arg4: memref<32x32xf32, #tpu.memory_space<vmem>>, %arg5: memref<32x32xf32, #tpu.memory_space<vmem>>, %arg6: memref<1x32xf32, #tpu.memory_space<vmem>>, %arg7: memref<1x32xf32, #tpu.memory_space<vmem>>, %arg8: memref<1x128xf32, #tpu.memory_space<vmem>>, %arg9: memref<32x128xf32, #tpu.memory_space<vmem>>, %arg10: memref<32x128xf32, #tpu.memory_space<vmem>>, %arg11: memref<1x128xf32, #tpu.memory_space<vmem>>, %arg12: memref<32x128xf32, #tpu.memory_space<vmem>>, %arg13: memref<32x128xf32, #tpu.memory_space<vmem>>, %arg14: memref<1x128xf32, #tpu.memory_space<vmem>>, %arg15: memref<32x128xf32, #tpu.memory_space<vmem>>, %arg16: memref<32x128xf32, #tpu.memory_space<vmem>>, %arg17: memref<1x128xf32, #tpu.memory_space<vmem>>, %arg18: memref<32x1xf32, #tpu.memory_space<vmem>>, %arg19: memref<32x1xf32, #tpu.memory_space<vmem>>, %arg20: memref<1x1xf32, #tpu.memory_space<vmem>>, %arg21: memref<2x1xf32, #tpu.memory_space<vmem>>, %arg22: memref<3x2x32xf32, #tpu.memory_space<vmem>>, %arg23: memref<3x2x32xf32, #tpu.memory_space<vmem>>) attributes {dimension_semantics = [], scalar_prefetch = 0 : i64, scratch_operands = 0 : i64, tpu.core_type = #tpu.core_type<tc>} {
    %c0 = arith.constant 0 : index
    %c0_0 = arith.constant 0 : index
    %c0_1 = arith.constant 0 : index
    %0 = vector.load %arg3[%c0, %c0_0, %c0_1] : memref<2x8x32xf32, #tpu.memory_space<vmem>>, vector<2x8x32xf32>
    %c2 = arith.constant 2 : index
    %c0_2 = arith.constant 0 : index
    %c0_3 = arith.constant 0 : index
    %1 = vector.load %arg1[%c2, %c0_2, %c0_3] : memref<3x2x32xf32, #tpu.memory_space<vmem>>, vector<1x2x32xf32>
    %2 = vector.shape_cast %1 : vector<1x2x32xf32> to vector<2x32xf32>
    %c0_4 = arith.constant 0 : index
    %c0_5 = arith.constant 0 : index
    %3 = vector.load %arg4[%c0_4, %c0_5] : memref<32x32xf32, #tpu.memory_space<vmem>>, vector<32x32xf32>
    %cst = arith.constant dense<0.000000e+00> : vector<2x32xf32>
    %4 = tpu.matmul %2, %3, %cst {dimension_numbers = #tpu.dot_dimension_numbers<[1], [0], [0], [1], [0, 0, 1, 1], [], []>} : vector<2x32xf32>, vector<32x32xf32>, vector<2x32xf32> -> vector<2x32xf32>
    %5 = vector.shape_cast %0 : vector<2x8x32xf32> to vector<16x32xf32>
    %c0_6 = arith.constant 0 : index
    %c0_7 = arith.constant 0 : index
    %6 = vector.load %arg5[%c0_6, %c0_7] : memref<32x32xf32, #tpu.memory_space<vmem>>, vector<32x32xf32>
    %cst_8 = arith.constant dense<0.000000e+00> : vector<16x32xf32>
    %7 = tpu.matmul %5, %6, %cst_8 {dimension_numbers = #tpu.dot_dimension_numbers<[1], [0], [0], [1], [0, 0, 1, 1], [], []>} : vector<16x32xf32>, vector<32x32xf32>, vector<16x32xf32> -> vector<16x32xf32>
    %8 = vector.shape_cast %7 : vector<16x32xf32> to vector<2x8x32xf32>
    %9 = vector.shape_cast %4 : vector<2x32xf32> to vector<2x1x32xf32>
    %10 = vector.broadcast %9 : vector<2x1x32xf32> to vector<2x8x32xf32>
    %11 = arith.addf %8, %10 : vector<2x8x32xf32>
    %c0_9 = arith.constant 0 : index
    %c0_10 = arith.constant 0 : index
    %12 = vector.load %arg6[%c0_9, %c0_10] : memref<1x32xf32, #tpu.memory_space<vmem>>, vector<1x32xf32>
    %13 = vector.shape_cast %12 : vector<1x32xf32> to vector<1x1x32xf32>
    %14 = vector.broadcast %13 : vector<1x1x32xf32> to vector<2x8x32xf32>
    %15 = arith.addf %11, %14 : vector<2x8x32xf32>
    %16 = math.tanh %15 : vector<2x8x32xf32>
    %c0_11 = arith.constant 0 : index
    %c0_12 = arith.constant 0 : index
    %17 = vector.load %arg7[%c0_11, %c0_12] : memref<1x32xf32, #tpu.memory_space<vmem>>, vector<1x32xf32>
    %18 = vector.shape_cast %17 : vector<1x32xf32> to vector<1x1x32xf32>
    %19 = vector.broadcast %18 : vector<1x1x32xf32> to vector<2x8x32xf32>
    %20 = arith.mulf %16, %19 : vector<2x8x32xf32>
    %cst_13 = arith.constant dense<0.000000e+00> : vector<2x8xf32>
    %21 = vector.multi_reduction <add>, %20, %cst_13 [2] : vector<2x8x32xf32> to vector<2x8xf32>
    %cst_14 = arith.constant dense<0xFF800000> : vector<2xf32>
    %22 = vector.multi_reduction <maximumf>, %21, %cst_14 [1] : vector<2x8xf32> to vector<2xf32>
    %23 = vector.shape_cast %22 : vector<2xf32> to vector<2x1xf32>
    %24 = vector.broadcast %23 : vector<2x1xf32> to vector<2x8xf32>
    %25 = arith.subf %21, %24 : vector<2x8xf32>
    %26 = math.exp %25 : vector<2x8xf32>
    %cst_15 = arith.constant dense<0.000000e+00> : vector<2xf32>
    %27 = vector.multi_reduction <add>, %26, %cst_15 [1] : vector<2x8xf32> to vector<2xf32>
    %28 = vector.shape_cast %27 : vector<2xf32> to vector<2x1xf32>
    %29 = tpu.reciprocal %28 {approx = true} : vector<2x1xf32> -> vector<2x1xf32>
    %30 = vector.broadcast %29 : vector<2x1xf32> to vector<2x8xf32>
    %31 = arith.mulf %26, %30 : vector<2x8xf32>
    %32 = vector.shape_cast %31 : vector<2x8xf32> to vector<2x8x1xf32>
    %33 = vector.broadcast %32 : vector<2x8x1xf32> to vector<2x8x32xf32>
    %34 = arith.mulf %33, %0 : vector<2x8x32xf32>
    %cst_16 = arith.constant dense<0.000000e+00> : vector<2x32xf32>
    %35 = vector.multi_reduction <add>, %34, %cst_16 [1] : vector<2x8x32xf32> to vector<2x32xf32>
    %c0_17 = arith.constant 0 : index
    %c0_18 = arith.constant 0 : index
    %36 = vector.load %arg9[%c0_17, %c0_18] : memref<32x128xf32, #tpu.memory_space<vmem>>, vector<32x128xf32>
    %cst_19 = arith.constant dense<0.000000e+00> : vector<2x128xf32>
    %37 = tpu.matmul %35, %36, %cst_19 {dimension_numbers = #tpu.dot_dimension_numbers<[1], [0], [0], [1], [0, 0, 1, 1], [], []>} : vector<2x32xf32>, vector<32x128xf32>, vector<2x128xf32> -> vector<2x128xf32>
    %c0_20 = arith.constant 0 : index
    %c0_21 = arith.constant 0 : index
    %c0_22 = arith.constant 0 : index
    %38 = vector.load %arg1[%c0_20, %c0_21, %c0_22] : memref<3x2x32xf32, #tpu.memory_space<vmem>>, vector<1x2x32xf32>
    %39 = vector.shape_cast %38 : vector<1x2x32xf32> to vector<2x32xf32>
    %c0_23 = arith.constant 0 : index
    %c0_24 = arith.constant 0 : index
    %40 = vector.load %arg10[%c0_23, %c0_24] : memref<32x128xf32, #tpu.memory_space<vmem>>, vector<32x128xf32>
    %cst_25 = arith.constant dense<0.000000e+00> : vector<2x128xf32>
    %41 = tpu.matmul %39, %40, %cst_25 {dimension_numbers = #tpu.dot_dimension_numbers<[1], [0], [0], [1], [0, 0, 1, 1], [], []>} : vector<2x32xf32>, vector<32x128xf32>, vector<2x128xf32> -> vector<2x128xf32>
    %42 = arith.addf %37, %41 : vector<2x128xf32>
    %c0_26 = arith.constant 0 : index
    %c0_27 = arith.constant 0 : index
    %43 = vector.load %arg11[%c0_26, %c0_27] : memref<1x128xf32, #tpu.memory_space<vmem>>, vector<1x128xf32>
    %44 = vector.broadcast %43 : vector<1x128xf32> to vector<2x128xf32>
    %45 = arith.addf %42, %44 : vector<2x128xf32>
    %c0_28 = arith.constant 0 : index
    %c0_29 = arith.constant 0 : index
    %46 = vector.load %arg0[%c0_28, %c0_29] : memref<2x1xf32, #tpu.memory_space<vmem>>, vector<2x1xf32>
    %c0_30 = arith.constant 0 : index
    %c0_31 = arith.constant 0 : index
    %47 = vector.load %arg8[%c0_30, %c0_31] : memref<1x128xf32, #tpu.memory_space<vmem>>, vector<1x128xf32>
    %48 = vector.broadcast %46 : vector<2x1xf32> to vector<2x128xf32>
    %49 = vector.broadcast %47 : vector<1x128xf32> to vector<2x128xf32>
    %50 = arith.mulf %48, %49 : vector<2x128xf32>
    %51 = arith.addf %45, %50 : vector<2x128xf32>
    %c0_32 = arith.constant 0 : index
    %c0_33 = arith.constant 0 : index
    %c0_34 = arith.constant 0 : index
    %52 = vector.load %arg2[%c0_32, %c0_33, %c0_34] : memref<3x2x32xf32, #tpu.memory_space<vmem>>, vector<1x2x32xf32>
    %53 = vector.shape_cast %52 : vector<1x2x32xf32> to vector<2x32xf32>
    %54 = vector.extract_strided_slice %51 {offsets = [0, 0], sizes = [2, 32], strides = [1, 1]} : vector<2x128xf32> to vector<2x32xf32>
    %55 = arith.negf %54 : vector<2x32xf32>
    %56 = math.exp %55 : vector<2x32xf32>
    %cst_35 = arith.constant 1.000000e+00 : f32
    %57 = vector.broadcast %cst_35 : f32 to vector<2x32xf32>
    %58 = arith.addf %57, %56 : vector<2x32xf32>
    %59 = arith.divf %57, %58 : vector<2x32xf32>
    %60 = vector.extract_strided_slice %51 {offsets = [0, 32], sizes = [2, 32], strides = [1, 1]} : vector<2x128xf32> to vector<2x32xf32>
    %61 = arith.negf %60 : vector<2x32xf32>
    %62 = math.exp %61 : vector<2x32xf32>
    %cst_36 = arith.constant 1.000000e+00 : f32
    %63 = vector.broadcast %cst_36 : f32 to vector<2x32xf32>
    %64 = arith.addf %63, %62 : vector<2x32xf32>
    %65 = arith.divf %63, %64 : vector<2x32xf32>
    %66 = vector.extract_strided_slice %51 {offsets = [0, 64], sizes = [2, 32], strides = [1, 1]} : vector<2x128xf32> to vector<2x32xf32>
    %67 = math.tanh %66 : vector<2x32xf32>
    %68 = vector.extract_strided_slice %51 {offsets = [0, 96], sizes = [2, 32], strides = [1, 1]} : vector<2x128xf32> to vector<2x32xf32>
    %69 = arith.negf %68 : vector<2x32xf32>
    %70 = math.exp %69 : vector<2x32xf32>
    %cst_37 = arith.constant 1.000000e+00 : f32
    %71 = vector.broadcast %cst_37 : f32 to vector<2x32xf32>
    %72 = arith.addf %71, %70 : vector<2x32xf32>
    %73 = arith.divf %71, %72 : vector<2x32xf32>
    %74 = arith.mulf %65, %53 : vector<2x32xf32>
    %75 = arith.mulf %59, %67 : vector<2x32xf32>
    %76 = arith.addf %74, %75 : vector<2x32xf32>
    %77 = math.tanh %76 : vector<2x32xf32>
    %78 = arith.mulf %73, %77 : vector<2x32xf32>
    %c0_38 = arith.constant 0 : index
    %c0_39 = arith.constant 0 : index
    %79 = vector.load %arg12[%c0_38, %c0_39] : memref<32x128xf32, #tpu.memory_space<vmem>>, vector<32x128xf32>
    %cst_40 = arith.constant dense<0.000000e+00> : vector<2x128xf32>
    %80 = tpu.matmul %78, %79, %cst_40 {dimension_numbers = #tpu.dot_dimension_numbers<[1], [0], [0], [1], [0, 0, 1, 1], [], []>} : vector<2x32xf32>, vector<32x128xf32>, vector<2x128xf32> -> vector<2x128xf32>
    %c1 = arith.constant 1 : index
    %c0_41 = arith.constant 0 : index
    %c0_42 = arith.constant 0 : index
    %81 = vector.load %arg1[%c1, %c0_41, %c0_42] : memref<3x2x32xf32, #tpu.memory_space<vmem>>, vector<1x2x32xf32>
    %82 = vector.shape_cast %81 : vector<1x2x32xf32> to vector<2x32xf32>
    %c0_43 = arith.constant 0 : index
    %c0_44 = arith.constant 0 : index
    %83 = vector.load %arg13[%c0_43, %c0_44] : memref<32x128xf32, #tpu.memory_space<vmem>>, vector<32x128xf32>
    %cst_45 = arith.constant dense<0.000000e+00> : vector<2x128xf32>
    %84 = tpu.matmul %82, %83, %cst_45 {dimension_numbers = #tpu.dot_dimension_numbers<[1], [0], [0], [1], [0, 0, 1, 1], [], []>} : vector<2x32xf32>, vector<32x128xf32>, vector<2x128xf32> -> vector<2x128xf32>
    %85 = arith.addf %80, %84 : vector<2x128xf32>
    %c0_46 = arith.constant 0 : index
    %c0_47 = arith.constant 0 : index
    %86 = vector.load %arg14[%c0_46, %c0_47] : memref<1x128xf32, #tpu.memory_space<vmem>>, vector<1x128xf32>
    %87 = vector.broadcast %86 : vector<1x128xf32> to vector<2x128xf32>
    %88 = arith.addf %85, %87 : vector<2x128xf32>
    %c1_48 = arith.constant 1 : index
    %c0_49 = arith.constant 0 : index
    %c0_50 = arith.constant 0 : index
    %89 = vector.load %arg2[%c1_48, %c0_49, %c0_50] : memref<3x2x32xf32, #tpu.memory_space<vmem>>, vector<1x2x32xf32>
    %90 = vector.shape_cast %89 : vector<1x2x32xf32> to vector<2x32xf32>
    %91 = vector.extract_strided_slice %88 {offsets = [0, 0], sizes = [2, 32], strides = [1, 1]} : vector<2x128xf32> to vector<2x32xf32>
    %92 = arith.negf %91 : vector<2x32xf32>
    %93 = math.exp %92 : vector<2x32xf32>
    %cst_51 = arith.constant 1.000000e+00 : f32
    %94 = vector.broadcast %cst_51 : f32 to vector<2x32xf32>
    %95 = arith.addf %94, %93 : vector<2x32xf32>
    %96 = arith.divf %94, %95 : vector<2x32xf32>
    %97 = vector.extract_strided_slice %88 {offsets = [0, 32], sizes = [2, 32], strides = [1, 1]} : vector<2x128xf32> to vector<2x32xf32>
    %98 = arith.negf %97 : vector<2x32xf32>
    %99 = math.exp %98 : vector<2x32xf32>
    %cst_52 = arith.constant 1.000000e+00 : f32
    %100 = vector.broadcast %cst_52 : f32 to vector<2x32xf32>
    %101 = arith.addf %100, %99 : vector<2x32xf32>
    %102 = arith.divf %100, %101 : vector<2x32xf32>
    %103 = vector.extract_strided_slice %88 {offsets = [0, 64], sizes = [2, 32], strides = [1, 1]} : vector<2x128xf32> to vector<2x32xf32>
    %104 = math.tanh %103 : vector<2x32xf32>
    %105 = vector.extract_strided_slice %88 {offsets = [0, 96], sizes = [2, 32], strides = [1, 1]} : vector<2x128xf32> to vector<2x32xf32>
    %106 = arith.negf %105 : vector<2x32xf32>
    %107 = math.exp %106 : vector<2x32xf32>
    %cst_53 = arith.constant 1.000000e+00 : f32
    %108 = vector.broadcast %cst_53 : f32 to vector<2x32xf32>
    %109 = arith.addf %108, %107 : vector<2x32xf32>
    %110 = arith.divf %108, %109 : vector<2x32xf32>
    %111 = arith.mulf %102, %90 : vector<2x32xf32>
    %112 = arith.mulf %96, %104 : vector<2x32xf32>
    %113 = arith.addf %111, %112 : vector<2x32xf32>
    %114 = math.tanh %113 : vector<2x32xf32>
    %115 = arith.mulf %110, %114 : vector<2x32xf32>
    %c0_54 = arith.constant 0 : index
    %c0_55 = arith.constant 0 : index
    %116 = vector.load %arg15[%c0_54, %c0_55] : memref<32x128xf32, #tpu.memory_space<vmem>>, vector<32x128xf32>
    %cst_56 = arith.constant dense<0.000000e+00> : vector<2x128xf32>
    %117 = tpu.matmul %115, %116, %cst_56 {dimension_numbers = #tpu.dot_dimension_numbers<[1], [0], [0], [1], [0, 0, 1, 1], [], []>} : vector<2x32xf32>, vector<32x128xf32>, vector<2x128xf32> -> vector<2x128xf32>
    %c0_57 = arith.constant 0 : index
    %c0_58 = arith.constant 0 : index
    %118 = vector.load %arg16[%c0_57, %c0_58] : memref<32x128xf32, #tpu.memory_space<vmem>>, vector<32x128xf32>
    %cst_59 = arith.constant dense<0.000000e+00> : vector<2x128xf32>
    %119 = tpu.matmul %2, %118, %cst_59 {dimension_numbers = #tpu.dot_dimension_numbers<[1], [0], [0], [1], [0, 0, 1, 1], [], []>} : vector<2x32xf32>, vector<32x128xf32>, vector<2x128xf32> -> vector<2x128xf32>
    %120 = arith.addf %117, %119 : vector<2x128xf32>
    %c0_60 = arith.constant 0 : index
    %c0_61 = arith.constant 0 : index
    %121 = vector.load %arg17[%c0_60, %c0_61] : memref<1x128xf32, #tpu.memory_space<vmem>>, vector<1x128xf32>
    %122 = vector.broadcast %121 : vector<1x128xf32> to vector<2x128xf32>
    %123 = arith.addf %120, %122 : vector<2x128xf32>
    %c2_62 = arith.constant 2 : index
    %c0_63 = arith.constant 0 : index
    %c0_64 = arith.constant 0 : index
    %124 = vector.load %arg2[%c2_62, %c0_63, %c0_64] : memref<3x2x32xf32, #tpu.memory_space<vmem>>, vector<1x2x32xf32>
    %125 = vector.shape_cast %124 : vector<1x2x32xf32> to vector<2x32xf32>
    %126 = vector.extract_strided_slice %123 {offsets = [0, 0], sizes = [2, 32], strides = [1, 1]} : vector<2x128xf32> to vector<2x32xf32>
    %127 = arith.negf %126 : vector<2x32xf32>
    %128 = math.exp %127 : vector<2x32xf32>
    %cst_65 = arith.constant 1.000000e+00 : f32
    %129 = vector.broadcast %cst_65 : f32 to vector<2x32xf32>
    %130 = arith.addf %129, %128 : vector<2x32xf32>
    %131 = arith.divf %129, %130 : vector<2x32xf32>
    %132 = vector.extract_strided_slice %123 {offsets = [0, 32], sizes = [2, 32], strides = [1, 1]} : vector<2x128xf32> to vector<2x32xf32>
    %133 = arith.negf %132 : vector<2x32xf32>
    %134 = math.exp %133 : vector<2x32xf32>
    %cst_66 = arith.constant 1.000000e+00 : f32
    %135 = vector.broadcast %cst_66 : f32 to vector<2x32xf32>
    %136 = arith.addf %135, %134 : vector<2x32xf32>
    %137 = arith.divf %135, %136 : vector<2x32xf32>
    %138 = vector.extract_strided_slice %123 {offsets = [0, 64], sizes = [2, 32], strides = [1, 1]} : vector<2x128xf32> to vector<2x32xf32>
    %139 = math.tanh %138 : vector<2x32xf32>
    %140 = vector.extract_strided_slice %123 {offsets = [0, 96], sizes = [2, 32], strides = [1, 1]} : vector<2x128xf32> to vector<2x32xf32>
    %141 = arith.negf %140 : vector<2x32xf32>
    %142 = math.exp %141 : vector<2x32xf32>
    %cst_67 = arith.constant 1.000000e+00 : f32
    %143 = vector.broadcast %cst_67 : f32 to vector<2x32xf32>
    %144 = arith.addf %143, %142 : vector<2x32xf32>
    %145 = arith.divf %143, %144 : vector<2x32xf32>
    %146 = arith.mulf %137, %125 : vector<2x32xf32>
    %147 = arith.mulf %131, %139 : vector<2x32xf32>
    %148 = arith.addf %146, %147 : vector<2x32xf32>
    %149 = math.tanh %148 : vector<2x32xf32>
    %150 = arith.mulf %145, %149 : vector<2x32xf32>
    %c0_68 = arith.constant 0 : index
    %c0_69 = arith.constant 0 : index
    %151 = vector.load %arg18[%c0_68, %c0_69] : memref<32x1xf32, #tpu.memory_space<vmem>>, vector<32x1xf32>
    %cst_70 = arith.constant dense<0.000000e+00> : vector<2x1xf32>
    %152 = tpu.matmul %150, %151, %cst_70 {dimension_numbers = #tpu.dot_dimension_numbers<[1], [0], [0], [1], [0, 0, 1, 1], [], []>} : vector<2x32xf32>, vector<32x1xf32>, vector<2x1xf32> -> vector<2x1xf32>
    %c0_71 = arith.constant 0 : index
    %c0_72 = arith.constant 0 : index
    %153 = vector.load %arg19[%c0_71, %c0_72] : memref<32x1xf32, #tpu.memory_space<vmem>>, vector<32x1xf32>
    %cst_73 = arith.constant dense<0.000000e+00> : vector<2x1xf32>
    %154 = tpu.matmul %35, %153, %cst_73 {dimension_numbers = #tpu.dot_dimension_numbers<[1], [0], [0], [1], [0, 0, 1, 1], [], []>} : vector<2x32xf32>, vector<32x1xf32>, vector<2x1xf32> -> vector<2x1xf32>
    %155 = arith.addf %152, %154 : vector<2x1xf32>
    %c0_74 = arith.constant 0 : index
    %c0_75 = arith.constant 0 : index
    %156 = vector.load %arg20[%c0_74, %c0_75] : memref<1x1xf32, #tpu.memory_space<vmem>>, vector<1x1xf32>
    %157 = vector.broadcast %156 : vector<1x1xf32> to vector<2x1xf32>
    %158 = arith.addf %155, %157 : vector<2x1xf32>
    %c0_76 = arith.constant 0 : index
    %c0_77 = arith.constant 0 : index
    %159 = vector.load %arg21[%c0_76, %c0_77] : memref<2x1xf32, #tpu.memory_space<vmem>>, vector<2x1xf32>
    tpu.vector_store %arg21[%c0_76, %c0_77], %158 {strides = array<i32>} : memref<2x1xf32, #tpu.memory_space<vmem>>, vector<2x1xf32>,
    %c0_78 = arith.constant 0 : index
    %c0_79 = arith.constant 0 : index
    %c0_80 = arith.constant 0 : index
    %160 = vector.load %arg22[%c0_78, %c0_79, %c0_80] : memref<3x2x32xf32, #tpu.memory_space<vmem>>, vector<1x2x32xf32>
    %161 = vector.shape_cast %160 : vector<1x2x32xf32> to vector<2x32xf32>
    %162 = vector.shape_cast %78 : vector<2x32xf32> to vector<1x2x32xf32>
    tpu.vector_store %arg22[%c0_78, %c0_79, %c0_80], %162 {strides = array<i32>} : memref<3x2x32xf32, #tpu.memory_space<vmem>>, vector<1x2x32xf32>,
    %c1_81 = arith.constant 1 : index
    %c0_82 = arith.constant 0 : index
    %c0_83 = arith.constant 0 : index
    %163 = vector.load %arg22[%c1_81, %c0_82, %c0_83] : memref<3x2x32xf32, #tpu.memory_space<vmem>>, vector<1x2x32xf32>
    %164 = vector.shape_cast %163 : vector<1x2x32xf32> to vector<2x32xf32>
    %165 = vector.shape_cast %115 : vector<2x32xf32> to vector<1x2x32xf32>
    tpu.vector_store %arg22[%c1_81, %c0_82, %c0_83], %165 {strides = array<i32>} : memref<3x2x32xf32, #tpu.memory_space<vmem>>, vector<1x2x32xf32>,
    %c2_84 = arith.constant 2 : index
    %c0_85 = arith.constant 0 : index
    %c0_86 = arith.constant 0 : index
    %166 = vector.load %arg22[%c2_84, %c0_85, %c0_86] : memref<3x2x32xf32, #tpu.memory_space<vmem>>, vector<1x2x32xf32>
    %167 = vector.shape_cast %166 : vector<1x2x32xf32> to vector<2x32xf32>
    %168 = vector.shape_cast %150 : vector<2x32xf32> to vector<1x2x32xf32>
    tpu.vector_store %arg22[%c2_84, %c0_85, %c0_86], %168 {strides = array<i32>} : memref<3x2x32xf32, #tpu.memory_space<vmem>>, vector<1x2x32xf32>,
    %c0_87 = arith.constant 0 : index
    %c0_88 = arith.constant 0 : index
    %c0_89 = arith.constant 0 : index
    %169 = vector.load %arg23[%c0_87, %c0_88, %c0_89] : memref<3x2x32xf32, #tpu.memory_space<vmem>>, vector<1x2x32xf32>
    %170 = vector.shape_cast %169 : vector<1x2x32xf32> to vector<2x32xf32>
    %171 = vector.shape_cast %76 : vector<2x32xf32> to vector<1x2x32xf32>
    tpu.vector_store %arg23[%c0_87, %c0_88, %c0_89], %171 {strides = array<i32>} : memref<3x2x32xf32, #tpu.memory_space<vmem>>, vector<1x2x32xf32>,
    %c1_90 = arith.constant 1 : index
    %c0_91 = arith.constant 0 : index
    %c0_92 = arith.constant 0 : index
    %172 = vector.load %arg23[%c1_90, %c0_91, %c0_92] : memref<3x2x32xf32, #tpu.memory_space<vmem>>, vector<1x2x32xf32>
    %173 = vector.shape_cast %172 : vector<1x2x32xf32> to vector<2x32xf32>
    %174 = vector.shape_cast %113 : vector<2x32xf32> to vector<1x2x32xf32>
    tpu.vector_store %arg23[%c1_90, %c0_91, %c0_92], %174 {strides = array<i32>} : memref<3x2x32xf32, #tpu.memory_space<vmem>>, vector<1x2x32xf32>,
    %c2_93 = arith.constant 2 : index
    %c0_94 = arith.constant 0 : index
    %c0_95 = arith.constant 0 : index
    %175 = vector.load %arg23[%c2_93, %c0_94, %c0_95] : memref<3x2x32xf32, #tpu.memory_space<vmem>>, vector<1x2x32xf32>
    %176 = vector.shape_cast %175 : vector<1x2x32xf32> to vector<2x32xf32>
    %177 = vector.shape_cast %148 : vector<2x32xf32> to vector<1x2x32xf32>
    tpu.vector_store %arg23[%c2_93, %c0_94, %c0_95], %177 {strides = array<i32>} : memref<3x2x32xf32, #tpu.memory_space<vmem>>, vector<1x2x32xf32>,
    return
  }
}

</mosaic_0001>

<llo_original>
// kernel: attention_decoder_forward.1
$region0: #{attention_decoder_forward.1}
  #allocation0 [shape = 'u32[]', space=smem, size = 0x4, offset = 0x4, fixed_abs, tag = 'smem constant byte address 0x4 - core index']
  #allocation1 [shape = 'u32[144,128]{1,0:T(1,128)}', space=vmem, size = 0x12000, scoped, tag = 'internal scratch']
  #allocation2 [shape = 'f32[1,1]{1,0:T(1,128)S(1)}', space=vmem, size = 0x200, scoped, tag = 'scoped memory for attention_decoder_forward.1']
  %s0 = inlined_call_operand.vmem [shape: f32[2,1], index: 0, kind: input, shape index: {}]
  %s1 = inlined_call_operand.vmem [shape: f32[3,2,32], index: 1, kind: input, shape index: {}]
  %s2 = inlined_call_operand.vmem [shape: f32[3,2,32], index: 2, kind: input, shape index: {}]
  %s3 = inlined_call_operand.vmem [shape: f32[2,8,32], index: 3, kind: input, shape index: {}]
  %s4 = inlined_call_operand.vmem [shape: f32[32,32], index: 4, kind: input, shape index: {}]
  %s5 = inlined_call_operand.vmem [shape: f32[32,32], index: 5, kind: input, shape index: {}]
  %s6 = inlined_call_operand.hbm [shape: f32[1,32], index: 6, kind: input, shape index: {}]
  %s7 = inlined_call_operand.hbm [shape: f32[1,32], index: 7, kind: input, shape index: {}]
  %s8 = inlined_call_operand.hbm [shape: f32[1,128], index: 8, kind: input, shape index: {}]
  %s9 = inlined_call_operand.vmem [shape: f32[32,128], index: 9, kind: input, shape index: {}]
  %s10 = inlined_call_operand.hbm [shape: f32[32,128], index: 10, kind: input, shape index: {}]
  %s11 = inlined_call_operand.hbm [shape: f32[1,128], index: 11, kind: input, shape index: {}]
  %s12 = inlined_call_operand.hbm [shape: f32[32,128], index: 12, kind: input, shape index: {}]
  %s13 = inlined_call_operand.hbm [shape: f32[32,128], index: 13, kind: input, shape index: {}]
  %s14 = inlined_call_operand.hbm [shape: f32[1,128], index: 14, kind: input, shape index: {}]
  %s15 = inlined_call_operand.hbm [shape: f32[32,128], index: 15, kind: input, shape index: {}]
  %s16 = inlined_call_operand.hbm [shape: f32[32,128], index: 16, kind: input, shape index: {}]
  %s17 = inlined_call_operand.hbm [shape: f32[1,128], index: 17, kind: input, shape index: {}]
  %s18 = inlined_call_operand.vmem [shape: f32[32,1], index: 18, kind: input, shape index: {}]
  %s19 = inlined_call_operand.vmem [shape: f32[32,1], index: 19, kind: input, shape index: {}]
  %s20 = inlined_call_operand.<no memory space> [shape: f32[1,1], index: 20, kind: input, shape index: {}]
  %s21 = inlined_call_operand.vmem [shape: f32[2,1], index: 21, kind: output, shape index: {0}]
  %s22 = inlined_call_operand.hbm [shape: f32[3,2,32], index: 22, kind: output, shape index: {1}]
  %s23 = inlined_call_operand.hbm [shape: f32[3,2,32], index: 23, kind: output, shape index: {2}]
  %24 = xla_tuple %s21, %s22, %s23
  %s25 = sld [smem:[#allocation0]]
  $region154: #{attention_decoder_forward.1} parent=0
    _
  %s27 = ssub.s32 1, %s25
  %s28 = scalar_select 0, %s27, %s25
  %v29 = vstv %s20
  %30 = vst [vmem:[#allocation2] sm:$0x1] %v29
  $region1: #{attention_decoder_forward.1} parent=0
    #allocation3 [shape = 'u8[512]{0}', space=vmem, size = 0x400, scoped, tag = 'input window, operand 6, single buffered']
    #allocation4 [shape = 's32[1]{0}', space=sflag, size = 0x4, scoped, tag = 'scoped memory for attention_decoder_forward.1']
    #allocation5 [shape = 's32[1]{0}', space=sflag, size = 0x4, scoped, tag = 'scoped memory for attention_decoder_forward.1']
    #allocation6 [shape = 'u8[512]{0}', space=vmem, size = 0x400, scoped, tag = 'input window, operand 7, single buffered']
    #allocation7 [shape = 's32[1]{0}', space=sflag, size = 0x4, scoped, tag = 'scoped memory for attention_decoder_forward.1']
    #allocation8 [shape = 'u8[512]{0}', space=vmem, size = 0x400, scoped, tag = 'input window, operand 8, single buffered']
    #allocation9 [shape = 'u8[16384]{0}', space=vmem, size = 0x4000, scoped, tag = 'input window, operand 10, single buffered']
    #allocation10 [shape = 's32[1]{0}', space=sflag, size = 0x4, scoped, tag = 'scoped memory for attention_decoder_forward.1']
    #allocation11 [shape = 'u8[512]{0}', space=vmem, size = 0x400, scoped, tag = 'input window, operand 11, single buffered']
    #allocation12 [shape = 'u8[16384]{0}', space=vmem, size = 0x4000, scoped, tag = 'input window, operand 12, single buffered']
    #allocation13 [shape = 's32[1]{0}', space=sflag, size = 0x4, scoped, tag = 'scoped memory for attention_decoder_forward.1']
    #allocation14 [shape = 'u8[16384]{0}', space=vmem, size = 0x4000, scoped, tag = 'input window, operand 13, single buffered']
    #allocation15 [shape = 'u8[512]{0}', space=vmem, size = 0x400, scoped, tag = 'input window, operand 14, single buffered']
    #allocation16 [shape = 's32[1]{0}', space=sflag, size = 0x4, scoped, tag = 'scoped memory for attention_decoder_forward.1']
    #allocation17 [shape = 'u8[16384]{0}', space=vmem, size = 0x4000, scoped, tag = 'input window, operand 15, single buffered']
    #allocation18 [shape = 'u8[16384]{0}', space=vmem, size = 0x4000, scoped, tag = 'input window, operand 16, single buffered']
    #allocation19 [shape = 's32[1]{0}', space=sflag, size = 0x4, scoped, tag = 'scoped memory for attention_decoder_forward.1']
    #allocation20 [shape = 'u8[512]{0}', space=vmem, size = 0x400, scoped, tag = 'input window, operand 17, single buffered']
    #allocation21 [shape = 'u8[3072]{0}', space=vmem, size = 0xc00, scoped, tag = 'output window, operand 1, single buffered']
    #allocation22 [shape = 'u8[3072]{0}', space=vmem, size = 0xc00, scoped, tag = 'output window, operand 2, single buffered']
    #allocation23 [shape = 's32[1]{0}', space=sflag, size = 0x4, scoped, tag = 'scoped memory for attention_decoder_forward.1']
    %31 = vsyncpa [#allocation4], 0
    %32 = vsyncpa [#allocation7], 0
    %33 = vsyncpa [#allocation10], 0
    %34 = vsyncpa [#allocation13], 0
    %35 = vsyncpa [#allocation16], 0
    %36 = vsyncpa [#allocation19], 0
    %37 = vsyncpa [#allocation5], 0
    %38 = vsyncpa [#allocation23], 0
    // Predicated region
    $region2: #{attention_decoder_forward.1} parent=1 // pred_check
      _
    $region3: #{attention_decoder_forward.1} parent=1 // pred_check_branch
      %40 = sbr.rel (0) target = $region5
    $region4: #{attention_decoder_forward.1} parent=1 // pred_region
      _
    $region5: #{attention_decoder_forward.1} parent=1 // pred_fallthru
      _
    // Predicated region
    $region6: #{attention_decoder_forward.1} parent=1 // pred_check
      _
    $region7: #{attention_decoder_forward.1} parent=1 // pred_check_branch
      %42 = sbr.rel (0) target = $region9
    $region8: #{attention_decoder_forward.1} parent=1 // pred_region
      _
    $region9: #{attention_decoder_forward.1} parent=1 // pred_fallthru
      _
    // Predicated region
    $region10: #{attention_decoder_forward.1} parent=1 // pred_check
      _
    $region11: #{attention_decoder_forward.1} parent=1 // pred_check_branch
      %44 = sbr.rel (0) target = $region13
    $region12: #{attention_decoder_forward.1} parent=1 // pred_region
      _
    $region13: #{attention_decoder_forward.1} parent=1 // pred_fallthru
      _
    // Predicated region
    $region14: #{attention_decoder_forward.1} parent=1 // pred_check
      _
    $region15: #{attention_decoder_forward.1} parent=1 // pred_check_branch
      %46 = sbr.rel (0) target = $region17
    $region16: #{attention_decoder_forward.1} parent=1 // pred_region
      _
    $region17: #{attention_decoder_forward.1} parent=1 // pred_fallthru
      _
    // Predicated region
    $region18: #{attention_decoder_forward.1} parent=1 // pred_check
      _
    $region19: #{attention_decoder_forward.1} parent=1 // pred_check_branch
      %48 = sbr.rel (0) target = $region21
    $region20: #{attention_decoder_forward.1} parent=1 // pred_region
      _
    $region21: #{attention_decoder_forward.1} parent=1 // pred_fallthru
      _
    // Predicated region
    $region22: #{attention_decoder_forward.1} parent=1 // pred_check
      _
    $region23: #{attention_decoder_forward.1} parent=1 // pred_check_branch
      %50 = sbr.rel (0) target = $region25
    $region24: #{attention_decoder_forward.1} parent=1 // pred_region
      _
    $region25: #{attention_decoder_forward.1} parent=1 // pred_fallthru
      _
    // Predicated region
    $region26: #{attention_decoder_forward.1} parent=1 // pred_check
      _
    $region27: #{attention_decoder_forward.1} parent=1 // pred_check_branch
      %52 = sbr.rel (0) target = $region29
    $region28: #{attention_decoder_forward.1} parent=1 // pred_region
      %s54 = ssub.s32 16, 16
      %55 = vsyncadd [#allocation4], %s54
      %s57 = sshll.u32 [#allocation3], 4
      %s58 = int_to_ptr.vmem [resolvable:$true] %s57
      %60 = dma.hbm_to_vmem [thread:$0]  %s6, 16, %s58, [#allocation4]
    $region29: #{attention_decoder_forward.1} parent=1 // pred_fallthru
      _
    // Predicated region
    $region30: #{attention_decoder_forward.1} parent=1 // pred_check
      _
    $region31: #{attention_decoder_forward.1} parent=1 // pred_check_branch
      %62 = sbr.rel (0) target = $region33
    $region32: #{attention_decoder_forward.1} parent=1 // pred_region
      %s64 = ssub.s32 16, 16
      %65 = vsyncadd [#allocation7], %s64
      %s67 = sshll.u32 [#allocation6], 4
      %s68 = int_to_ptr.vmem [resolvable:$true] %s67
      %70 = dma.hbm_to_vmem [thread:$0]  %s7, 16, %s68, [#allocation7]
    $region33: #{attention_decoder_forward.1} parent=1 // pred_fallthru
      _
    // Predicated region
    $region34: #{attention_decoder_forward.1} parent=1 // pred_check
      _
    $region35: #{attention_decoder_forward.1} parent=1 // pred_check_branch
      %72 = sbr.rel (0) target = $region37
    $region36: #{attention_decoder_forward.1} parent=1 // pred_region
      %s74 = ssub.s32 16, 16
      %75 = vsyncadd [#allocation7], %s74
      %s77 = sshll.u32 [#allocation8], 4
      %s78 = int_to_ptr.vmem [resolvable:$true] %s77
      %80 = dma.hbm_to_vmem [thread:$0]  %s8, 16, %s78, [#allocation7]
    $region37: #{attention_decoder_forward.1} parent=1 // pred_fallthru
      _
    // Predicated region
    $region38: #{attention_decoder_forward.1} parent=1 // pred_check
      _
    $region39: #{attention_decoder_forward.1} parent=1 // pred_check_branch
      %82 = sbr.rel (0) target = $region41
    $region40: #{attention_decoder_forward.1} parent=1 // pred_region
      _
    $region41: #{attention_decoder_forward.1} parent=1 // pred_fallthru
      _
    // Predicated region
    $region42: #{attention_decoder_forward.1} parent=1 // pred_check
      _
    $region43: #{attention_decoder_forward.1} parent=1 // pred_check_branch
      %84 = sbr.rel (0) target = $region45
    $region44: #{attention_decoder_forward.1} parent=1 // pred_region
      %s86 = ssub.s32 512, 512
      %87 = vsyncadd [#allocation10], %s86
      %s88 = sshll.u32 [#allocation9], 4
      %s89 = int_to_ptr.vmem [resolvable:$true] %s88
      %94 = dma.hbm_to_vmem [thread:$0]  %s10, 512, %s89, [#allocation10], 128, 128, 8
    $region45: #{attention_decoder_forward.1} parent=1 // pred_fallthru
      _
    // Predicated region
    $region46: #{attention_decoder_forward.1} parent=1 // pred_check
      _
    $region47: #{attention_decoder_forward.1} parent=1 // pred_check_branch
      %96 = sbr.rel (0) target = $region49
    $region48: #{attention_decoder_forward.1} parent=1 // pred_region
      %s98 = ssub.s32 16, 16
      %99 = vsyncadd [#allocation10], %s98
      %s101 = sshll.u32 [#allocation11], 4
      %s102 = int_to_ptr.vmem [resolvable:$true] %s101
      %104 = dma.hbm_to_vmem [thread:$0]  %s11, 16, %s102, [#allocation10]
    $region49: #{attention_decoder_forward.1} parent=1 // pred_fallthru
      _
    // Predicated region
    $region50: #{attention_decoder_forward.1} parent=1 // pred_check
      _
    $region51: #{attention_decoder_forward.1} parent=1 // pred_check_branch
      %106 = sbr.rel (0) target = $region53
    $region52: #{attention_decoder_forward.1} parent=1 // pred_region
      %s108 = ssub.s32 512, 512
      %109 = vsyncadd [#allocation13], %s108
      %s110 = sshll.u32 [#allocation12], 4
      %s111 = int_to_ptr.vmem [resolvable:$true] %s110
      %116 = dma.hbm_to_vmem [thread:$0]  %s12, 512, %s111, [#allocation13], 128, 128, 8
    $region53: #{attention_decoder_forward.1} parent=1 // pred_fallthru
      _
    // Predicated region
    $region54: #{attention_decoder_forward.1} parent=1 // pred_check
      _
    $region55: #{attention_decoder_forward.1} parent=1 // pred_check_branch
      %118 = sbr.rel (0) target = $region57
    $region56: #{attention_decoder_forward.1} parent=1 // pred_region
      %s120 = ssub.s32 512, 512
      %121 = vsyncadd [#allocation13], %s120
      %s122 = sshll.u32 [#allocation14], 4
      %s123 = int_to_ptr.vmem [resolvable:$true] %s122
      %128 = dma.hbm_to_vmem [thread:$0]  %s13, 512, %s123, [#allocation13], 128, 128, 8
    $region57: #{attention_decoder_forward.1} parent=1 // pred_fallthru
      _
    // Predicated region
    $region58: #{attention_decoder_forward.1} parent=1 // pred_check
      _
    $region59: #{attention_decoder_forward.1} parent=1 // pred_check_branch
      %130 = sbr.rel (0) target = $region61
    $region60: #{attention_decoder_forward.1} parent=1 // pred_region
      %s132 = ssub.s32 16, 16
      %133 = vsyncadd [#allocation16], %s132
      %s135 = sshll.u32 [#allocation15], 4
      %s136 = int_to_ptr.vmem [resolvable:$true] %s135
      %138 = dma.hbm_to_vmem [thread:$0]  %s14, 16, %s136, [#allocation16]
    $region61: #{attention_decoder_forward.1} parent=1 // pred_fallthru
      _
    // Predicated region
    $region62: #{attention_decoder_forward.1} parent=1 // pred_check
      _
    $region63: #{attention_decoder_forward.1} parent=1 // pred_check_branch
      %140 = sbr.rel (0) target = $region65
    $region64: #{attention_decoder_forward.1} parent=1 // pred_region
      %s142 = ssub.s32 512, 512
      %143 = vsyncadd [#allocation16], %s142
      %s144 = sshll.u32 [#allocation17], 4
      %s145 = int_to_ptr.vmem [resolvable:$true] %s144
      %150 = dma.hbm_to_vmem [thread:$0]  %s15, 512, %s145, [#allocation16], 128, 128, 8
    $region65: #{attention_decoder_forward.1} parent=1 // pred_fallthru
      _
    // Predicated region
    $region66: #{attention_decoder_forward.1} parent=1 // pred_check
      _
    $region67: #{attention_decoder_forward.1} parent=1 // pred_check_branch
      %152 = sbr.rel (0) target = $region69
    $region68: #{attention_decoder_forward.1} parent=1 // pred_region
      %s154 = ssub.s32 512, 512
      %155 = vsyncadd [#allocation19], %s154
      %s156 = sshll.u32 [#allocation18], 4
      %s157 = int_to_ptr.vmem [resolvable:$true] %s156
      %162 = dma.hbm_to_vmem [thread:$0]  %s16, 512, %s157, [#allocation19], 128, 128, 8
    $region69: #{attention_decoder_forward.1} parent=1 // pred_fallthru
      _
    // Predicated region
    $region70: #{attention_decoder_forward.1} parent=1 // pred_check
      _
    $region71: #{attention_decoder_forward.1} parent=1 // pred_check_branch
      %164 = sbr.rel (0) target = $region73
    $region72: #{attention_decoder_forward.1} parent=1 // pred_region
      %s166 = ssub.s32 16, 16
      %167 = vsyncadd [#allocation19], %s166
      %s169 = sshll.u32 [#allocation20], 4
      %s170 = int_to_ptr.vmem [resolvable:$true] %s169
      %172 = dma.hbm_to_vmem [thread:$0]  %s17, 16, %s170, [#allocation19]
    $region73: #{attention_decoder_forward.1} parent=1 // pred_fallthru
      _
    // Predicated region
    $region74: #{attention_decoder_forward.1} parent=1 // pred_check
      _
    $region75: #{attention_decoder_forward.1} parent=1 // pred_check_branch
      %174 = sbr.rel (0) target = $region77
    $region76: #{attention_decoder_forward.1} parent=1 // pred_region
      _
    $region77: #{attention_decoder_forward.1} parent=1 // pred_fallthru
      _
    // Predicated region
    $region78: #{attention_decoder_forward.1} parent=1 // pred_check
      _
    $region79: #{attention_decoder_forward.1} parent=1 // pred_check_branch
      %176 = sbr.rel (0) target = $region81
    $region80: #{attention_decoder_forward.1} parent=1 // pred_region
      _
    $region81: #{attention_decoder_forward.1} parent=1 // pred_fallthru
      _
    // Predicated region
    $region82: #{attention_decoder_forward.1} parent=1 // pred_check
      _
    $region83: #{attention_decoder_forward.1} parent=1 // pred_check_branch
      %178 = sbr.rel (0) target = $region85
    $region84: #{attention_decoder_forward.1} parent=1 // pred_region
      _
    $region85: #{attention_decoder_forward.1} parent=1 // pred_fallthru
      _
    // Predicated region
    $region86: #{attention_decoder_forward.1} parent=1 // pred_check
      _
    $region87: #{attention_decoder_forward.1} parent=1 // pred_check_branch
      %180 = sbr.rel (0) target = $region89
    $region88: #{attention_decoder_forward.1} parent=1 // pred_region
      %181 = dma.done [#allocation4], 16
    $region89: #{attention_decoder_forward.1} parent=1 // pred_fallthru
      _
    // Predicated region
    $region90: #{attention_decoder_forward.1} parent=1 // pred_check
      _
    $region91: #{attention_decoder_forward.1} parent=1 // pred_check_branch
      %183 = sbr.rel (0) target = $region93
    $region92: #{attention_decoder_forward.1} parent=1 // pred_region
      %184 = dma.done [#allocation7], 16
    $region93: #{attention_decoder_forward.1} parent=1 // pred_fallthru
      _
    // Predicated region
    $region94: #{attention_decoder_forward.1} parent=1 // pred_check
      _
    $region95: #{attention_decoder_forward.1} parent=1 // pred_check_branch
      %186 = sbr.rel (0) target = $region97
    $region96: #{attention_decoder_forward.1} parent=1 // pred_region
      %187 = dma.done [#allocation7], 16
    $region97: #{attention_decoder_forward.1} parent=1 // pred_fallthru
      _
    // Predicated region
    $region98: #{attention_decoder_forward.1} parent=1 // pred_check
      _
    $region99: #{attention_decoder_forward.1} parent=1 // pred_check_branch
      %189 = sbr.rel (0) target = $region101
    $region100: #{attention_decoder_forward.1} parent=1 // pred_region
      %190 = dma.done [#allocation10], 512
    $region101: #{attention_decoder_forward.1} parent=1 // pred_fallthru
      _
    // Predicated region
    $region102: #{attention_decoder_forward.1} parent=1 // pred_check
      _
    $region103: #{attention_decoder_forward.1} parent=1 // pred_check_branch
      %192 = sbr.rel (0) target = $region105
    $region104: #{attention_decoder_forward.1} parent=1 // pred_region
      %193 = dma.done [#allocation10], 16
    $region105: #{attention_decoder_forward.1} parent=1 // pred_fallthru
      _
    // Predicated region
    $region106: #{attention_decoder_forward.1} parent=1 // pred_check
      _
    $region107: #{attention_decoder_forward.1} parent=1 // pred_check_branch
      %195 = sbr.rel (0) target = $region109
    $region108: #{attention_decoder_forward.1} parent=1 // pred_region
      %196 = dma.done [#allocation13], 512
    $region109: #{attention_decoder_forward.1} parent=1 // pred_fallthru
      _
    // Predicated region
    $region110: #{attention_decoder_forward.1} parent=1 // pred_check
      _
    $region111: #{attention_decoder_forward.1} parent=1 // pred_check_branch
      %198 = sbr.rel (0) target = $region113
    $region112: #{attention_decoder_forward.1} parent=1 // pred_region
      %199 = dma.done [#allocation13], 512
    $region113: #{attention_decoder_forward.1} parent=1 // pred_fallthru
      _
    // Predicated region
    $region114: #{attention_decoder_forward.1} parent=1 // pred_check
      _
    $region115: #{attention_decoder_forward.1} parent=1 // pred_check_branch
      %201 = sbr.rel (0) target = $region117
    $region116: #{attention_decoder_forward.1} parent=1 // pred_region
      %202 = dma.done [#allocation16], 16
    $region117: #{attention_decoder_forward.1} parent=1 // pred_fallthru
      _
    // Predicated region
    $region118: #{attention_decoder_forward.1} parent=1 // pred_check
      _
    $region119: #{attention_decoder_forward.1} parent=1 // pred_check_branch
      %204 = sbr.rel (0) target = $region121
    $region120: #{attention_decoder_forward.1} parent=1 // pred_region
      %205 = dma.done [#allocation16], 512
    $region121: #{attention_decoder_forward.1} parent=1 // pred_fallthru
      _
    // Predicated region
    $region122: #{attention_decoder_forward.1} parent=1 // pred_check
      _
    $region123: #{attention_decoder_forward.1} parent=1 // pred_check_branch
      %207 = sbr.rel (0) target = $region125
    $region124: #{attention_decoder_forward.1} parent=1 // pred_region
      %208 = dma.done [#allocation19], 512
    $region125: #{attention_decoder_forward.1} parent=1 // pred_fallthru
      _
    // Predicated region
    $region126: #{attention_decoder_forward.1} parent=1 // pred_check
      _
    $region127: #{attention_decoder_forward.1} parent=1 // pred_check_branch
      %210 = sbr.rel (0) target = $region129
    $region128: #{attention_decoder_forward.1} parent=1 // pred_region
      %211 = dma.done [#allocation19], 16
    $region129: #{attention_decoder_forward.1} parent=1 // pred_fallthru
      _
    %v212 = vld [vmem:[%s3] sm:$0xff]
    %v213 = vld [vmem:[%s3 + $0x8] sm:$0xff]
    %s214 = scalar_lea.vmem %s1, 4
    %v215 = vld [vmem:[%s214] sm:$0x3]
    %v216 = vld [vmem:[%s4] sm:$0xff]
    %v217 = vld [vmem:[%s4 + $0x8] sm:$0xff]
    %v218 = vld [vmem:[%s4 + $0x10] sm:$0xff]
    %v219 = vld [vmem:[%s4 + $0x18] sm:$0xff]
    %vm220 = vcmask 261120
    %v222 = vsel %vm220, %v215, 0
    %224 = vmatprep.subr.mxu0 0.0
    %225 = vmatpush1.msra.mxu0 %v216
    %226 = vmatprep.subr.mxu0 0.0
    %227 = vmatpush1.msra.mxu0 %v217
    %228 = vmatprep.subr.mxu0 0.0
    %229 = vmatpush1.msra.mxu0 %v218
    %230 = vmatprep.subr.mxu0 0.0
    %231 = vmatpush1.msra.mxu0 %v219
    %232 = vmatprep.subr.mxu0 0.0
    %233 = vmatpush1.msra.mxu0 0.0
    %234 = vmatprep.subr.mxu0 0.0
    %235 = vmatpush1.msra.mxu0 0.0
    %236 = vmatprep.subr.mxu0 0.0
    %237 = vmatpush1.msra.mxu0 0.0
    %238 = vmatprep.subr.mxu0 0.0
    %239 = vmatpush1.msra.mxu0 0.0
    %240 = vmatprep.subr.mxu0 0.0
    %241 = vmatpush1.msra.mxu0 0.0
    %242 = vmatprep.subr.mxu0 0.0
    %243 = vmatpush1.msra.mxu0 0.0
    %244 = vmatprep.subr.mxu0 0.0
    %245 = vmatpush1.msra.mxu0 0.0
    %246 = vmatprep.subr.mxu0 0.0
    %247 = vmatpush1.msra.mxu0 0.0
    %248 = vmatprep.subr.mxu0 0.0
    %249 = vmatpush1.msra.mxu0 0.0
    %250 = vmatprep.subr.mxu0 0.0
    %251 = vmatpush1.msra.mxu0 0.0
    %252 = vmatprep.subr.mxu0 0.0
    %253 = vmatpush1.msra.mxu0 0.0
    %254 = vmatprep.subr.mxu0 0.0
    %255 = vmatpush1.msra.mxu0 0.0
    %256 = vmatprep.subr.mxu0 0.0
    %257 = vmatpush1.msra.mxu0 0.0
    %258 = vmatprep.subr.mxu0 0.0
    %259 = vmatpush1.msra.mxu0 0.0
    %260 = vmatprep.subr.mxu0 0.0
    %261 = vmatpush1.msra.mxu0 0.0
    %262 = vmatprep.subr.mxu0 0.0
    %263 = vmatpush1.msra.mxu0 0.0
    %264 = vmatprep.subr.mxu0 0.0
    %265 = vmatpush1.msra.mxu0 0.0
    %266 = vmatprep.subr.mxu0 0.0
    %267 = vmatpush1.msra.mxu0 0.0
    %268 = vmatprep.subr.mxu0 0.0
    %269 = vmatpush1.msra.mxu0 0.0
    %270 = vmatprep.subr.mxu0 0.0
    %271 = vmatpush1.msra.mxu0 0.0
    %272 = vmatprep.subr.mxu0 0.0
    %273 = vmatpush1.msra.mxu0 0.0
    %274 = vmatprep.subr.mxu0 0.0
    %275 = vmatpush1.msra.mxu0 0.0
    %276 = vmatprep.subr.mxu0 0.0
    %277 = vmatpush1.msra.mxu0 0.0
    %278 = vmatprep.subr.mxu0 0.0
    %279 = vmatpush1.msra.mxu0 0.0
    %280 = vmatprep.subr.mxu0 0.0
    %281 = vmatpush1.msra.mxu0 0.0
    %282 = vmatprep.subr.mxu0 0.0
    %283 = vmatpush1.msra.mxu0 0.0
    %284 = vmatprep.subr.mxu0 0.0
    %285 = vmatpush1.msra.mxu0 0.0
    %286 = vmatprep.subr.mxu0 0.0
    %287 = vmatpush1.msra.mxu0 0.0
    %288 = vmatprep.mubr.f32.mxu0 0.0
    %289 = vmatmul.mubr.f32.gmra.mrb[0].mxu0 %v222
    %v290 = vpop.f32.mrb[0].mxu0
    %v291 = vadd.f32 0.0, %v290
    %v292 = vpop.f32.mrb[0].mxu0
    %293 = vdwg.mxu0
    %v294 = vld [vmem:[%s5] sm:$0xff]
    %v295 = vld [vmem:[%s5 + $0x8] sm:$0xff]
    %v296 = vld [vmem:[%s5 + $0x10] sm:$0xff]
    %v297 = vld [vmem:[%s5 + $0x18] sm:$0xff]
    %v299 = vsel %vm220, %v212, 0
    %v302 = vsel %vm220, %v213, 0
    %304 = vmatprep.subr.mxu0 0.0
    %305 = vmatpush1.msra.mxu0 %v294
    %306 = vmatprep.subr.mxu0 0.0
    %307 = vmatpush1.msra.mxu0 %v295
    %308 = vmatprep.subr.mxu0 0.0
    %309 = vmatpush1.msra.mxu0 %v296
    %310 = vmatprep.subr.mxu0 0.0
    %311 = vmatpush1.msra.mxu0 %v297
    %312 = vmatprep.subr.mxu0 0.0
    %313 = vmatpush1.msra.mxu0 0.0
    %314 = vmatprep.subr.mxu0 0.0
    %315 = vmatpush1.msra.mxu0 0.0
    %316 = vmatprep.subr.mxu0 0.0
    %317 = vmatpush1.msra.mxu0 0.0
    %318 = vmatprep.subr.mxu0 0.0
    %319 = vmatpush1.msra.mxu0 0.0
    %320 = vmatprep.subr.mxu0 0.0
    %321 = vmatpush1.msra.mxu0 0.0
    %322 = vmatprep.subr.mxu0 0.0
    %323 = vmatpush1.msra.mxu0 0.0
    %324 = vmatprep.subr.mxu0 0.0
    %325 = vmatpush1.msra.mxu0 0.0
    %326 = vmatprep.subr.mxu0 0.0
    %327 = vmatpush1.msra.mxu0 0.0
    %328 = vmatprep.subr.mxu0 0.0
    %329 = vmatpush1.msra.mxu0 0.0
    %330 = vmatprep.subr.mxu0 0.0
    %331 = vmatpush1.msra.mxu0 0.0
    %332 = vmatprep.subr.mxu0 0.0
    %333 = vmatpush1.msra.mxu0 0.0
    %334 = vmatprep.subr.mxu0 0.0
    %335 = vmatpush1.msra.mxu0 0.0
    %336 = vmatprep.subr.mxu0 0.0
    %337 = vmatpush1.msra.mxu0 0.0
    %338 = vmatprep.subr.mxu0 0.0
    %339 = vmatpush1.msra.mxu0 0.0
    %340 = vmatprep.subr.mxu0 0.0
    %341 = vmatpush1.msra.mxu0 0.0
    %342 = vmatprep.subr.mxu0 0.0
    %343 = vmatpush1.msra.mxu0 0.0
    %344 = vmatprep.subr.mxu0 0.0
    %345 = vmatpush1.msra.mxu0 0.0
    %346 = vmatprep.subr.mxu0 0.0
    %347 = vmatpush1.msra.mxu0 0.0
    %348 = vmatprep.subr.mxu0 0.0
    %349 = vmatpush1.msra.mxu0 0.0
    %350 = vmatprep.subr.mxu0 0.0
    %351 = vmatpush1.msra.mxu0 0.0
    %352 = vmatprep.subr.mxu0 0.0
    %353 = vmatpush1.msra.mxu0 0.0
    %354 = vmatprep.subr.mxu0 0.0
    %355 = vmatpush1.msra.mxu0 0.0
    %356 = vmatprep.subr.mxu0 0.0
    %357 = vmatpush1.msra.mxu0 0.0
    %358 = vmatprep.subr.mxu0 0.0
    %359 = vmatpush1.msra.mxu0 0.0
    %360 = vmatprep.subr.mxu0 0.0
    %361 = vmatpush1.msra.mxu0 0.0
    %362 = vmatprep.subr.mxu0 0.0
    %363 = vmatpush1.msra.mxu0 0.0
    %364 = vmatprep.subr.mxu0 0.0
    %365 = vmatpush1.msra.mxu0 0.0
    %366 = vmatprep.subr.mxu0 0.0
    %367 = vmatpush1.msra.mxu0 0.0
    %368 = vmatprep.mubr.f32.mxu0 0.0
    %369 = vmatmul.mubr.f32.gmra.mrb[0].mxu0 %v299
    %v370 = vpop.f32.mrb[0].mxu0
    %v371 = vadd.f32 0.0, %v370
    %v372 = vpop.f32.mrb[0].mxu0
    %373 = vmatprep.mubr.f32.mxu0 0.0
    %374 = vmatmul.mubr.f32.gmra.mrb[0].mxu0 %v302
    %v375 = vpop.f32.mrb[0].mxu0
    %v376 = vadd.f32 0.0, %v375
    %v377 = vpop.f32.mrb[0].mxu0
    %378 = vdwg.mxu0
    %v381 = vunpack.c.l.s4 1966171168
    %v382 = vunpack.c.0.s8 %v381
    %v383 = vlaneseq
    %v384 = vshrl.u32 %v383, 7
    %v385 = vsub.s32 %v382, %v384
    %v386 = vrot.slane %v291, %v385
    %v387 = vcombine.high %v386, %v386
    %v389 = vunpack.c.l.s4 1966171168
    %v390 = vunpack.c.0.s8 %v389
    %v391 = vlaneseq
    %v392 = vshrl.u32 %v391, 7
    %v393 = vsub.s32 %v390, %v392
    %v394 = vrot.slane %v386, %v393
    %v396 = vunpack.c.l.s4 1966171168
    %v397 = vunpack.c.0.s8 %v396
    %v398 = vlaneseq
    %v399 = vshrl.u32 %v398, 7
    %v400 = vsub.s32 %v397, %v399
    %v401 = vrot.slane %v387, %v400
    %v402 = vlaneseq
    %v403 = vshrl.u32 %v402, 7
    %v404 = vsub.s32 0, %v403
    %v405 = vrot.slane %v394, %v404
    %v406 = vlaneseq
    %v407 = vshrl.u32 %v406, 7
    %v408 = vsub.s32 0, %v407
    %v409 = vrot.slane %v401, %v408
    %v412 = vadd.f32 %v371, %v405
    %v413 = vadd.f32 %v376, %v409
    %v414 = vld [vmem:[#allocation3] sm:$0x1]
    %v416 = vlaneseq
    %v417 = vshrl.u32 %v416, 7
    %v418 = vsub.s32 0, %v417
    %v419 = vrot.slane %v414, %v418
    %v421 = vadd.f32 %v412, %v419
    %v422 = vadd.f32 %v413, %v419
    %v423 = vtanh.pop %v421
    %v424 = vtanh.pop %v422
    %v425 = vld [vmem:[#allocation6] sm:$0x1]
    %v427 = vlaneseq
    %v428 = vshrl.u32 %v427, 7
    %v429 = vsub.s32 0, %v428
    %v430 = vrot.slane %v425, %v429
    %v432 = vmul.f32 %v423, %v430
    %v433 = vmul.f32 %v424, %v430
    %v434 = vsel %vm220, %v432, 0.0
    %435 = vadd.xlane.f32.xlu0 %v434
    %v436 = vpop.xlane.xlu0 %435
    %v437 = vsel %vm220, %v433, 0.0
    %438 = vadd.xlane.f32.xlu0 %v437
    %v439 = vpop.xlane.xlu0 %438
    %v442 = vlaneseq
    %v443 = vand.u32 %v442, 127
    %v444 = vlaneseq
    %v445 = vshrl.u32 %v444, 7
    %v446 = vsub.s32 %v443, %v445
    %v447 = vrot.slane %v436, %v446
    %v448 = vlaneseq
    %v449 = vshrl.u32 %v448, 7
    %v450 = vsub.s32 %v443, %v449
    %v451 = vrot.slane %v439, %v450
    %vm452 = vcmask 1041409
    %v453 = vsel %vm452, %v451, %v447
    %vm455 = vcmask 58368
    %v456 = vsel %vm455, %v453, -inf
    %457 = vmax.xlane.f32.xlu0 %v456
    %v458 = vpop.xlane.xlu0 %457
    %v460 = vlaneseq
    %v461 = vshrl.u32 %v460, 7
    %v462 = vsub.s32 0, %v461
    %v463 = vrot.slane %v458, %v462
    %v464 = vlaneseq
    %v465 = vshrl.u32 %v464, 7
    %v466 = vsub.s32 1, %v465
    %v467 = vrot.slane %v458, %v466
    %v470 = vsub.f32 %v436, %v463
    %v471 = vsub.f32 %v439, %v467
    %v472 = vmul.f32 %v470, 1.442695
    %v473 = vpow.pop %v472
    %v474 = vmul.f32 %v471, 1.442695
    %v475 = vpow.pop %v474
    %478 = vset.pattern.permute.xlu0 0
    %479 = vperm.xlu0 %478, %v473
    %v480 = vpop.permute.xlu0 %479
    %481 = vset.pattern.permute.xlu0 0
    %482 = vperm.xlu0 %481, %v475
    %v483 = vpop.permute.xlu0 %482
    %v484 = vlaneseq
    %v485 = vshrl.u32 %v484, 7
    %v486 = vsub.s32 %v443, %v485
    %v487 = vrot.slane %v480, %v486
    %v488 = vlaneseq
    %v489 = vshrl.u32 %v488, 7
    %v490 = vsub.s32 %v443, %v489
    %v491 = vrot.slane %v483, %v490
    %v492 = vsel %vm452, %v491, %v487
    %v494 = vsel %vm455, %v492, 0.0
    %495 = vadd.xlane.f32.xlu0 %v494
    %v496 = vpop.xlane.xlu0 %495
    %v497 = vrcp.pop %v496
    %v499 = vlaneseq
    %v500 = vshrl.u32 %v499, 7
    %v501 = vsub.s32 0, %v500
    %v502 = vrot.slane %v497, %v501
    %v503 = vlaneseq
    %v504 = vshrl.u32 %v503, 7
    %v505 = vsub.s32 1, %v504
    %v506 = vrot.slane %v497, %v505
    %v509 = vmul.f32 %v473, %v502
    %v510 = vmul.f32 %v475, %v506
    %512 = vset.pattern.permute.xlu0 0
    %513 = vperm.xlu0 %512, %v509
    %v514 = vpop.permute.xlu0 %513
    %517 = vset.pattern.permute.xlu0 0
    %518 = vperm.xlu0 %517, %v510
    %v519 = vpop.permute.xlu0 %518
    %v521 = vmul.f32 %v514, %v212
    %v522 = vmul.f32 %v519, %v213
    %v523 = vsel %vm220, %v521, 0.0
    %v524 = vrot.slane %v523, 4
    %v525 = vadd.f32 %v523, %v524
    %v526 = vrot.slane %v525, 2
    %v527 = vadd.f32 %v525, %v526
    %v528 = vrot.slane %v527, 1
    %v529 = vadd.f32 %v527, %v528
    %v530 = vsel %vm220, %v522, 0.0
    %v531 = vrot.slane %v530, 4
    %v532 = vadd.f32 %v530, %v531
    %v533 = vrot.slane %v532, 2
    %v534 = vadd.f32 %v532, %v533
    %v535 = vrot.slane %v534, 1
    %v536 = vadd.f32 %v534, %v535
    %v537 = vld [vmem:[%s9] sm:$0xff]
    %v538 = vld [vmem:[%s9 + $0x8] sm:$0xff]
    %v539 = vld [vmem:[%s9 + $0x10] sm:$0xff]
    %v540 = vld [vmem:[%s9 + $0x18] sm:$0xff]
    %v541 = vld [vmem:[%s1] sm:$0x3]
    %v542 = vld [vmem:[#allocation9] sm:$0xff]
    %v543 = vld [vmem:[#allocation9 + $0x8] sm:$0xff]
    %v544 = vld [vmem:[#allocation9 + $0x10] sm:$0xff]
    %v545 = vld [vmem:[#allocation9 + $0x18] sm:$0xff]
    %v547 = vsel %vm220, %v541, 0
    %549 = vmatprep.subr.mxu0 0.0
    %550 = vmatpush1.msra.mxu0 %v542
    %551 = vmatprep.subr.mxu0 0.0
    %552 = vmatpush1.msra.mxu0 %v543
    %553 = vmatprep.subr.mxu0 0.0
    %554 = vmatpush1.msra.mxu0 %v544
    %555 = vmatprep.subr.mxu0 0.0
    %556 = vmatpush1.msra.mxu0 %v545
    %557 = vmatprep.subr.mxu0 0.0
    %558 = vmatpush1.msra.mxu0 0.0
    %559 = vmatprep.subr.mxu0 0.0
    %560 = vmatpush1.msra.mxu0 0.0
    %561 = vmatprep.subr.mxu0 0.0
    %562 = vmatpush1.msra.mxu0 0.0
    %563 = vmatprep.subr.mxu0 0.0
    %564 = vmatpush1.msra.mxu0 0.0
    %565 = vmatprep.subr.mxu0 0.0
    %566 = vmatpush1.msra.mxu0 0.0
    %567 = vmatprep.subr.mxu0 0.0
    %568 = vmatpush1.msra.mxu0 0.0
    %569 = vmatprep.subr.mxu0 0.0
    %570 = vmatpush1.msra.mxu0 0.0
    %571 = vmatprep.subr.mxu0 0.0
    %572 = vmatpush1.msra.mxu0 0.0
    %573 = vmatprep.subr.mxu0 0.0
    %574 = vmatpush1.msra.mxu0 0.0
    %575 = vmatprep.subr.mxu0 0.0
    %576 = vmatpush1.msra.mxu0 0.0
    %577 = vmatprep.subr.mxu0 0.0
    %578 = vmatpush1.msra.mxu0 0.0
    %579 = vmatprep.subr.mxu0 0.0
    %580 = vmatpush1.msra.mxu0 0.0
    %581 = vmatprep.subr.mxu0 0.0
    %582 = vmatpush1.msra.mxu0 0.0
    %583 = vmatprep.subr.mxu0 0.0
    %584 = vmatpush1.msra.mxu0 0.0
    %585 = vmatprep.subr.mxu0 0.0
    %586 = vmatpush1.msra.mxu0 0.0
    %587 = vmatprep.subr.mxu0 0.0
    %588 = vmatpush1.msra.mxu0 0.0
    %589 = vmatprep.subr.mxu0 0.0
    %590 = vmatpush1.msra.mxu0 0.0
    %591 = vmatprep.subr.mxu0 0.0
    %592 = vmatpush1.msra.mxu0 0.0
    %593 = vmatprep.subr.mxu0 0.0
    %594 = vmatpush1.msra.mxu0 0.0
    %595 = vmatprep.subr.mxu0 0.0
    %596 = vmatpush1.msra.mxu0 0.0
    %597 = vmatprep.subr.mxu0 0.0
    %598 = vmatpush1.msra.mxu0 0.0
    %599 = vmatprep.subr.mxu0 0.0
    %600 = vmatpush1.msra.mxu0 0.0
    %601 = vmatprep.subr.mxu0 0.0
    %602 = vmatpush1.msra.mxu0 0.0
    %603 = vmatprep.subr.mxu0 0.0
    %604 = vmatpush1.msra.mxu0 0.0
    %605 = vmatprep.subr.mxu0 0.0
    %606 = vmatpush1.msra.mxu0 0.0
    %607 = vmatprep.subr.mxu0 0.0
    %608 = vmatpush1.msra.mxu0 0.0
    %609 = vmatprep.subr.mxu0 0.0
    %610 = vmatpush1.msra.mxu0 0.0
    %611 = vmatprep.subr.mxu0 0.0
    %612 = vmatpush1.msra.mxu0 0.0
    %613 = vmatprep.mubr.f32.mxu0 0.0
    %614 = vmatmul.mubr.f32.gmra.mrb[0].mxu0 %v547
    %v615 = vpop.f32.mrb[0].mxu0
    %v616 = vadd.f32 0.0, %v615
    %v617 = vpop.f32.mrb[0].mxu0
    %618 = vdwg.mxu0
    %v621 = vsel %vm452, %v536, %v529
    %v622 = vsel %vm220, %v621, 0
    %624 = vmatprep.subr.mxu0 0.0
    %625 = vmatpush1.msra.mxu0 %v537
    %626 = vmatprep.subr.mxu0 0.0
    %627 = vmatpush1.msra.mxu0 %v538
    %628 = vmatprep.subr.mxu0 0.0
    %629 = vmatpush1.msra.mxu0 %v539
    %630 = vmatprep.subr.mxu0 0.0
    %631 = vmatpush1.msra.mxu0 %v540
    %632 = vmatprep.subr.mxu0 0.0
    %633 = vmatpush1.msra.mxu0 0.0
    %634 = vmatprep.subr.mxu0 0.0
    %635 = vmatpush1.msra.mxu0 0.0
    %636 = vmatprep.subr.mxu0 0.0
    %637 = vmatpush1.msra.mxu0 0.0
    %638 = vmatprep.subr.mxu0 0.0
    %639 = vmatpush1.msra.mxu0 0.0
    %640 = vmatprep.subr.mxu0 0.0
    %641 = vmatpush1.msra.mxu0 0.0
    %642 = vmatprep.subr.mxu0 0.0
    %643 = vmatpush1.msra.mxu0 0.0
    %644 = vmatprep.subr.mxu0 0.0
    %645 = vmatpush1.msra.mxu0 0.0
    %646 = vmatprep.subr.mxu0 0.0
    %647 = vmatpush1.msra.mxu0 0.0
    %648 = vmatprep.subr.mxu0 0.0
    %649 = vmatpush1.msra.mxu0 0.0
    %650 = vmatprep.subr.mxu0 0.0
    %651 = vmatpush1.msra.mxu0 0.0
    %652 = vmatprep.subr.mxu0 0.0
    %653 = vmatpush1.msra.mxu0 0.0
    %654 = vmatprep.subr.mxu0 0.0
    %655 = vmatpush1.msra.mxu0 0.0
    %656 = vmatprep.subr.mxu0 0.0
    %657 = vmatpush1.msra.mxu0 0.0
    %658 = vmatprep.subr.mxu0 0.0
    %659 = vmatpush1.msra.mxu0 0.0
    %660 = vmatprep.subr.mxu0 0.0
    %661 = vmatpush1.msra.mxu0 0.0
    %662 = vmatprep.subr.mxu0 0.0
    %663 = vmatpush1.msra.mxu0 0.0
    %664 = vmatprep.subr.mxu0 0.0
    %665 = vmatpush1.msra.mxu0 0.0
    %666 = vmatprep.subr.mxu0 0.0
    %667 = vmatpush1.msra.mxu0 0.0
    %668 = vmatprep.subr.mxu0 0.0
    %669 = vmatpush1.msra.mxu0 0.0
    %670 = vmatprep.subr.mxu0 0.0
    %671 = vmatpush1.msra.mxu0 0.0
    %672 = vmatprep.subr.mxu0 0.0
    %673 = vmatpush1.msra.mxu0 0.0
    %674 = vmatprep.subr.mxu0 0.0
    %675 = vmatpush1.msra.mxu0 0.0
    %676 = vmatprep.subr.mxu0 0.0
    %677 = vmatpush1.msra.mxu0 0.0
    %678 = vmatprep.subr.mxu0 0.0
    %679 = vmatpush1.msra.mxu0 0.0
    %680 = vmatprep.subr.mxu0 0.0
    %681 = vmatpush1.msra.mxu0 0.0
    %682 = vmatprep.subr.mxu0 0.0
    %683 = vmatpush1.msra.mxu0 0.0
    %684 = vmatprep.subr.mxu0 0.0
    %685 = vmatpush1.msra.mxu0 0.0
    %686 = vmatprep.subr.mxu0 0.0
    %687 = vmatpush1.msra.mxu0 0.0
    %688 = vmatprep.mubr.f32.mxu0 0.0
    %689 = vmatmul.mubr.f32.gmra.mrb[0].mxu0 %v622
    %v690 = vpop.f32.mrb[0].mxu0
    %v691 = vadd.f32 %v616, %v690
    %v692 = vpop.f32.mrb[0].mxu0
    %693 = vdwg.mxu0
    %v694 = vld [vmem:[#allocation11] sm:$0x1]
    %v696 = vlaneseq
    %v697 = vshrl.u32 %v696, 7
    %v698 = vsub.s32 0, %v697
    %v699 = vrot.slane %v694, %v698
    %v701 = vadd.f32 %v691, %v699
    %v702 = vld [vmem:[%s0] sm:$0x3]
    %v703 = vld [vmem:[#allocation8] sm:$0x1]
    %705 = vset.pattern.permute.xlu0 0
    %706 = vperm.xlu0 %705, %v702
    %v707 = vpop.permute.xlu0 %706
    %v710 = vlaneseq
    %v711 = vshrl.u32 %v710, 7
    %v712 = vsub.s32 0, %v711
    %v713 = vrot.slane %v703, %v712
    %v715 = vmul.f32 %v707, %v713
    %v716 = vadd.f32 %v701, %v715
    %v717 = vld [vmem:[%s2] sm:$0x3]
    %v718 = vxor.u32 %v716, 2147483648
    %v719 = vmul.f32 %v718, 1.442695
    %v720 = vpow.pop %v719
    %v721 = vadd.f32 %v720, 1.0
    %v722 = vrcp.pop %v721
    %v723 = vmul.f32 1.0, %v722
    %v724 = vtanh.pop %v716
    %726 = vrot.lane.b32.xlu0 %v717, 32
    %v727 = vpop.permute.xlu0 %726
    %v729 = vmul.f32 %v723, %v727
    %731 = vrot.lane.b32.xlu0 %v724, 64
    %v732 = vpop.permute.xlu0 %731
    %v734 = vmul.f32 %v723, %v732
    %736 = vrot.lane.b32.xlu0 %v734, 32
    %v737 = vpop.permute.xlu0 %736
    %v739 = vadd.f32 %v729, %v737
    %v740 = vtanh.pop %v739
    %742 = vrot.lane.b32.xlu0 %v740, 64
    %v743 = vpop.permute.xlu0 %742
    %v745 = vmul.f32 %v723, %v743
    %v746 = vld [vmem:[#allocation12] sm:$0xff]
    %v747 = vld [vmem:[#allocation12 + $0x8] sm:$0xff]
    %v748 = vld [vmem:[#allocation12 + $0x10] sm:$0xff]
    %v749 = vld [vmem:[#allocation12 + $0x18] sm:$0xff]
    %s750 = scalar_lea.vmem %s1, 2
    %v751 = vld [vmem:[%s750] sm:$0x3]
    %v752 = vld [vmem:[#allocation14] sm:$0xff]
    %v753 = vld [vmem:[#allocation14 + $0x8] sm:$0xff]
    %v754 = vld [vmem:[#allocation14 + $0x10] sm:$0xff]
    %v755 = vld [vmem:[#allocation14 + $0x18] sm:$0xff]
    %v757 = vsel %vm220, %v751, 0
    %759 = vmatprep.subr.mxu0 0.0
    %760 = vmatpush1.msra.mxu0 %v752
    %761 = vmatprep.subr.mxu0 0.0
    %762 = vmatpush1.msra.mxu0 %v753
    %763 = vmatprep.subr.mxu0 0.0
    %764 = vmatpush1.msra.mxu0 %v754
    %765 = vmatprep.subr.mxu0 0.0
    %766 = vmatpush1.msra.mxu0 %v755
    %767 = vmatprep.subr.mxu0 0.0
    %768 = vmatpush1.msra.mxu0 0.0
    %769 = vmatprep.subr.mxu0 0.0
    %770 = vmatpush1.msra.mxu0 0.0
    %771 = vmatprep.subr.mxu0 0.0
    %772 = vmatpush1.msra.mxu0 0.0
    %773 = vmatprep.subr.mxu0 0.0
    %774 = vmatpush1.msra.mxu0 0.0
    %775 = vmatprep.subr.mxu0 0.0
    %776 = vmatpush1.msra.mxu0 0.0
    %777 = vmatprep.subr.mxu0 0.0
    %778 = vmatpush1.msra.mxu0 0.0
    %779 = vmatprep.subr.mxu0 0.0
    %780 = vmatpush1.msra.mxu0 0.0
    %781 = vmatprep.subr.mxu0 0.0
    %782 = vmatpush1.msra.mxu0 0.0
    %783 = vmatprep.subr.mxu0 0.0
    %784 = vmatpush1.msra.mxu0 0.0
    %785 = vmatprep.subr.mxu0 0.0
    %786 = vmatpush1.msra.mxu0 0.0
    %787 = vmatprep.subr.mxu0 0.0
    %788 = vmatpush1.msra.mxu0 0.0
    %789 = vmatprep.subr.mxu0 0.0
    %790 = vmatpush1.msra.mxu0 0.0
    %791 = vmatprep.subr.mxu0 0.0
    %792 = vmatpush1.msra.mxu0 0.0
    %793 = vmatprep.subr.mxu0 0.0
    %794 = vmatpush1.msra.mxu0 0.0
    %795 = vmatprep.subr.mxu0 0.0
    %796 = vmatpush1.msra.mxu0 0.0
    %797 = vmatprep.subr.mxu0 0.0
    %798 = vmatpush1.msra.mxu0 0.0
    %799 = vmatprep.subr.mxu0 0.0
    %800 = vmatpush1.msra.mxu0 0.0
    %801 = vmatprep.subr.mxu0 0.0
    %802 = vmatpush1.msra.mxu0 0.0
    %803 = vmatprep.subr.mxu0 0.0
    %804 = vmatpush1.msra.mxu0 0.0
    %805 = vmatprep.subr.mxu0 0.0
    %806 = vmatpush1.msra.mxu0 0.0
    %807 = vmatprep.subr.mxu0 0.0
    %808 = vmatpush1.msra.mxu0 0.0
    %809 = vmatprep.subr.mxu0 0.0
    %810 = vmatpush1.msra.mxu0 0.0
    %811 = vmatprep.subr.mxu0 0.0
    %812 = vmatpush1.msra.mxu0 0.0
    %813 = vmatprep.subr.mxu0 0.0
    %814 = vmatpush1.msra.mxu0 0.0
    %815 = vmatprep.subr.mxu0 0.0
    %816 = vmatpush1.msra.mxu0 0.0
    %817 = vmatprep.subr.mxu0 0.0
    %818 = vmatpush1.msra.mxu0 0.0
    %819 = vmatprep.subr.mxu0 0.0
    %820 = vmatpush1.msra.mxu0 0.0
    %821 = vmatprep.subr.mxu0 0.0
    %822 = vmatpush1.msra.mxu0 0.0
    %823 = vmatprep.mubr.f32.mxu0 0.0
    %824 = vmatmul.mubr.f32.gmra.mrb[0].mxu0 %v757
    %v825 = vpop.f32.mrb[0].mxu0
    %v826 = vadd.f32 0.0, %v825
    %v827 = vpop.f32.mrb[0].mxu0
    %828 = vdwg.mxu0
    %830 = vrot.lane.b32.xlu0 %v745, 32
    %v831 = vpop.permute.xlu0 %830
    %v832 = vsel %vm220, %v831, 0
    %834 = vmatprep.subr.mxu0 0.0
    %835 = vmatpush1.msra.mxu0 %v746
    %836 = vmatprep.subr.mxu0 0.0
    %837 = vmatpush1.msra.mxu0 %v747
    %838 = vmatprep.subr.mxu0 0.0
    %839 = vmatpush1.msra.mxu0 %v748
    %840 = vmatprep.subr.mxu0 0.0
    %841 = vmatpush1.msra.mxu0 %v749
    %842 = vmatprep.subr.mxu0 0.0
    %843 = vmatpush1.msra.mxu0 0.0
    %844 = vmatprep.subr.mxu0 0.0
    %845 = vmatpush1.msra.mxu0 0.0
    %846 = vmatprep.subr.mxu0 0.0
    %847 = vmatpush1.msra.mxu0 0.0
    %848 = vmatprep.subr.mxu0 0.0
    %849 = vmatpush1.msra.mxu0 0.0
    %850 = vmatprep.subr.mxu0 0.0
    %851 = vmatpush1.msra.mxu0 0.0
    %852 = vmatprep.subr.mxu0 0.0
    %853 = vmatpush1.msra.mxu0 0.0
    %854 = vmatprep.subr.mxu0 0.0
    %855 = vmatpush1.msra.mxu0 0.0
    %856 = vmatprep.subr.mxu0 0.0
    %857 = vmatpush1.msra.mxu0 0.0
    %858 = vmatprep.subr.mxu0 0.0
    %859 = vmatpush1.msra.mxu0 0.0
    %860 = vmatprep.subr.mxu0 0.0
    %861 = vmatpush1.msra.mxu0 0.0
    %862 = vmatprep.subr.mxu0 0.0
    %863 = vmatpush1.msra.mxu0 0.0
    %864 = vmatprep.subr.mxu0 0.0
    %865 = vmatpush1.msra.mxu0 0.0
    %866 = vmatprep.subr.mxu0 0.0
    %867 = vmatpush1.msra.mxu0 0.0
    %868 = vmatprep.subr.mxu0 0.0
    %869 = vmatpush1.msra.mxu0 0.0
    %870 = vmatprep.subr.mxu0 0.0
    %871 = vmatpush1.msra.mxu0 0.0
    %872 = vmatprep.subr.mxu0 0.0
    %873 = vmatpush1.msra.mxu0 0.0
    %874 = vmatprep.subr.mxu0 0.0
    %875 = vmatpush1.msra.mxu0 0.0
    %876 = vmatprep.subr.mxu0 0.0
    %877 = vmatpush1.msra.mxu0 0.0
    %878 = vmatprep.subr.mxu0 0.0
    %879 = vmatpush1.msra.mxu0 0.0
    %880 = vmatprep.subr.mxu0 0.0
    %881 = vmatpush1.msra.mxu0 0.0
    %882 = vmatprep.subr.mxu0 0.0
    %883 = vmatpush1.msra.mxu0 0.0
    %884 = vmatprep.subr.mxu0 0.0
    %885 = vmatpush1.msra.mxu0 0.0
    %886 = vmatprep.subr.mxu0 0.0
    %887 = vmatpush1.msra.mxu0 0.0
    %888 = vmatprep.subr.mxu0 0.0
    %889 = vmatpush1.msra.mxu0 0.0
    %890 = vmatprep.subr.mxu0 0.0
    %891 = vmatpush1.msra.mxu0 0.0
    %892 = vmatprep.subr.mxu0 0.0
    %893 = vmatpush1.msra.mxu0 0.0
    %894 = vmatprep.subr.mxu0 0.0
    %895 = vmatpush1.msra.mxu0 0.0
    %896 = vmatprep.subr.mxu0 0.0
    %897 = vmatpush1.msra.mxu0 0.0
    %898 = vmatprep.mubr.f32.mxu0 0.0
    %899 = vmatmul.mubr.f32.gmra.mrb[0].mxu0 %v832
    %v900 = vpop.f32.mrb[0].mxu0
    %v901 = vadd.f32 %v826, %v900
    %v902 = vpop.f32.mrb[0].mxu0
    %903 = vdwg.mxu0
    %v904 = vld [vmem:[#allocation15] sm:$0x1]
    %v906 = vlaneseq
    %v907 = vshrl.u32 %v906, 7
    %v908 = vsub.s32 0, %v907
    %v909 = vrot.slane %v904, %v908
    %v911 = vadd.f32 %v901, %v909
    %s912 = scalar_lea.vmem %s2, 2
    %v913 = vld [vmem:[%s912] sm:$0x3]
    %v914 = vxor.u32 %v911, 2147483648
    %v915 = vmul.f32 %v914, 1.442695
    %v916 = vpow.pop %v915
    %v917 = vadd.f32 %v916, 1.0
    %v918 = vrcp.pop %v917
    %v919 = vmul.f32 1.0, %v918
    %v920 = vtanh.pop %v911
    %922 = vrot.lane.b32.xlu0 %v913, 32
    %v923 = vpop.permute.xlu0 %922
    %v925 = vmul.f32 %v919, %v923
    %927 = vrot.lane.b32.xlu0 %v920, 64
    %v928 = vpop.permute.xlu0 %927
    %v930 = vmul.f32 %v919, %v928
    %932 = vrot.lane.b32.xlu0 %v930, 32
    %v933 = vpop.permute.xlu0 %932
    %v935 = vadd.f32 %v925, %v933
    %v936 = vtanh.pop %v935
    %938 = vrot.lane.b32.xlu0 %v936, 64
    %v939 = vpop.permute.xlu0 %938
    %v941 = vmul.f32 %v919, %v939
    %v942 = vld [vmem:[#allocation17] sm:$0xff]
    %v943 = vld [vmem:[#allocation17 + $0x8] sm:$0xff]
    %v944 = vld [vmem:[#allocation17 + $0x10] sm:$0xff]
    %v945 = vld [vmem:[#allocation17 + $0x18] sm:$0xff]
    %v946 = vld [vmem:[#allocation18] sm:$0xff]
    %v947 = vld [vmem:[#allocation18 + $0x8] sm:$0xff]
    %v948 = vld [vmem:[#allocation18 + $0x10] sm:$0xff]
    %v949 = vld [vmem:[#allocation18 + $0x18] sm:$0xff]
    %950 = vmatprep.subr.mxu0 0.0
    %951 = vmatpush1.msra.mxu0 %v946
    %952 = vmatprep.subr.mxu0 0.0
    %953 = vmatpush1.msra.mxu0 %v947
    %954 = vmatprep.subr.mxu0 0.0
    %955 = vmatpush1.msra.mxu0 %v948
    %956 = vmatprep.subr.mxu0 0.0
    %957 = vmatpush1.msra.mxu0 %v949
    %958 = vmatprep.subr.mxu0 0.0
    %959 = vmatpush1.msra.mxu0 0.0
    %960 = vmatprep.subr.mxu0 0.0
    %961 = vmatpush1.msra.mxu0 0.0
    %962 = vmatprep.subr.mxu0 0.0
    %963 = vmatpush1.msra.mxu0 0.0
    %964 = vmatprep.subr.mxu0 0.0
    %965 = vmatpush1.msra.mxu0 0.0
    %966 = vmatprep.subr.mxu0 0.0
    %967 = vmatpush1.msra.mxu0 0.0
    %968 = vmatprep.subr.mxu0 0.0
    %969 = vmatpush1.msra.mxu0 0.0
    %970 = vmatprep.subr.mxu0 0.0
    %971 = vmatpush1.msra.mxu0 0.0
    %972 = vmatprep.subr.mxu0 0.0
    %973 = vmatpush1.msra.mxu0 0.0
    %974 = vmatprep.subr.mxu0 0.0
    %975 = vmatpush1.msra.mxu0 0.0
    %976 = vmatprep.subr.mxu0 0.0
    %977 = vmatpush1.msra.mxu0 0.0
    %978 = vmatprep.subr.mxu0 0.0
    %979 = vmatpush1.msra.mxu0 0.0
    %980 = vmatprep.subr.mxu0 0.0
    %981 = vmatpush1.msra.mxu0 0.0
    %982 = vmatprep.subr.mxu0 0.0
    %983 = vmatpush1.msra.mxu0 0.0
    %984 = vmatprep.subr.mxu0 0.0
    %985 = vmatpush1.msra.mxu0 0.0
    %986 = vmatprep.subr.mxu0 0.0
    %987 = vmatpush1.msra.mxu0 0.0
    %988 = vmatprep.subr.mxu0 0.0
    %989 = vmatpush1.msra.mxu0 0.0
    %990 = vmatprep.subr.mxu0 0.0
    %991 = vmatpush1.msra.mxu0 0.0
    %992 = vmatprep.subr.mxu0 0.0
    %993 = vmatpush1.msra.mxu0 0.0
    %994 = vmatprep.subr.mxu0 0.0
    %995 = vmatpush1.msra.mxu0 0.0
    %996 = vmatprep.subr.mxu0 0.0
    %997 = vmatpush1.msra.mxu0 0.0
    %998 = vmatprep.subr.mxu0 0.0
    %999 = vmatpush1.msra.mxu0 0.0
    %1000 = vmatprep.subr.mxu0 0.0
    %1001 = vmatpush1.msra.mxu0 0.0
    %1002 = vmatprep.subr.mxu0 0.0
    %1003 = vmatpush1.msra.mxu0 0.0
    %1004 = vmatprep.subr.mxu0 0.0
    %1005 = vmatpush1.msra.mxu0 0.0
    %1006 = vmatprep.subr.mxu0 0.0
    %1007 = vmatpush1.msra.mxu0 0.0
    %1008 = vmatprep.subr.mxu0 0.0
    %1009 = vmatpush1.msra.mxu0 0.0
    %1010 = vmatprep.subr.mxu0 0.0
    %1011 = vmatpush1.msra.mxu0 0.0
    %1012 = vmatprep.subr.mxu0 0.0
    %1013 = vmatpush1.msra.mxu0 0.0
    %1014 = vmatprep.mubr.f32.mxu0 0.0
    %1015 = vmatmul.mubr.f32.gmra.mrb[0].mxu0 %v222
    %v1016 = vpop.f32.mrb[0].mxu0
    %v1017 = vadd.f32 0.0, %v1016
    %v1018 = vpop.f32.mrb[0].mxu0
    %1019 = vdwg.mxu0
    %1021 = vrot.lane.b32.xlu0 %v941, 32
    %v1022 = vpop.permute.xlu0 %1021
    %v1023 = vsel %vm220, %v1022, 0
    %1025 = vmatprep.subr.mxu0 0.0
    %1026 = vmatpush1.msra.mxu0 %v942
    %1027 = vmatprep.subr.mxu0 0.0
    %1028 = vmatpush1.msra.mxu0 %v943
    %1029 = vmatprep.subr.mxu0 0.0
    %1030 = vmatpush1.msra.mxu0 %v944
    %1031 = vmatprep.subr.mxu0 0.0
    %1032 = vmatpush1.msra.mxu0 %v945
    %1033 = vmatprep.subr.mxu0 0.0
    %1034 = vmatpush1.msra.mxu0 0.0
    %1035 = vmatprep.subr.mxu0 0.0
    %1036 = vmatpush1.msra.mxu0 0.0
    %1037 = vmatprep.subr.mxu0 0.0
    %1038 = vmatpush1.msra.mxu0 0.0
    %1039 = vmatprep.subr.mxu0 0.0
    %1040 = vmatpush1.msra.mxu0 0.0
    %1041 = vmatprep.subr.mxu0 0.0
    %1042 = vmatpush1.msra.mxu0 0.0
    %1043 = vmatprep.subr.mxu0 0.0
    %1044 = vmatpush1.msra.mxu0 0.0
    %1045 = vmatprep.subr.mxu0 0.0
    %1046 = vmatpush1.msra.mxu0 0.0
    %1047 = vmatprep.subr.mxu0 0.0
    %1048 = vmatpush1.msra.mxu0 0.0
    %1049 = vmatprep.subr.mxu0 0.0
    %1050 = vmatpush1.msra.mxu0 0.0
    %1051 = vmatprep.subr.mxu0 0.0
    %1052 = vmatpush1.msra.mxu0 0.0
    %1053 = vmatprep.subr.mxu0 0.0
    %1054 = vmatpush1.msra.mxu0 0.0
    %1055 = vmatprep.subr.mxu0 0.0
    %1056 = vmatpush1.msra.mxu0 0.0
    %1057 = vmatprep.subr.mxu0 0.0
    %1058 = vmatpush1.msra.mxu0 0.0
    %1059 = vmatprep.subr.mxu0 0.0
    %1060 = vmatpush1.msra.mxu0 0.0
    %1061 = vmatprep.subr.mxu0 0.0
    %1062 = vmatpush1.msra.mxu0 0.0
    %1063 = vmatprep.subr.mxu0 0.0
    %1064 = vmatpush1.msra.mxu0 0.0
    %1065 = vmatprep.subr.mxu0 0.0
    %1066 = vmatpush1.msra.mxu0 0.0
    %1067 = vmatprep.subr.mxu0 0.0
    %1068 = vmatpush1.msra.mxu0 0.0
    %1069 = vmatprep.subr.mxu0 0.0
    %1070 = vmatpush1.msra.mxu0 0.0
    %1071 = vmatprep.subr.mxu0 0.0
    %1072 = vmatpush1.msra.mxu0 0.0
    %1073 = vmatprep.subr.mxu0 0.0
    %1074 = vmatpush1.msra.mxu0 0.0
    %1075 = vmatprep.subr.mxu0 0.0
    %1076 = vmatpush1.msra.mxu0 0.0
    %1077 = vmatprep.subr.mxu0 0.0
    %1078 = vmatpush1.msra.mxu0 0.0
    %1079 = vmatprep.subr.mxu0 0.0
    %1080 = vmatpush1.msra.mxu0 0.0
    %1081 = vmatprep.subr.mxu0 0.0
    %1082 = vmatpush1.msra.mxu0 0.0
    %1083 = vmatprep.subr.mxu0 0.0
    %1084 = vmatpush1.msra.mxu0 0.0
    %1085 = vmatprep.subr.mxu0 0.0
    %1086 = vmatpush1.msra.mxu0 0.0
    %1087 = vmatprep.subr.mxu0 0.0
    %1088 = vmatpush1.msra.mxu0 0.0
    %1089 = vmatprep.mubr.f32.mxu0 0.0
    %1090 = vmatmul.mubr.f32.gmra.mrb[0].mxu0 %v1023
    %v1091 = vpop.f32.mrb[0].mxu0
    %v1092 = vadd.f32 %v1017, %v1091
    %v1093 = vpop.f32.mrb[0].mxu0
    %1094 = vdwg.mxu0
    %v1095 = vld [vmem:[#allocation20] sm:$0x1]
    %v1097 = vlaneseq
    %v1098 = vshrl.u32 %v1097, 7
    %v1099 = vsub.s32 0, %v1098
    %v1100 = vrot.slane %v1095, %v1099
    %v1102 = vadd.f32 %v1092, %v1100
    %s1103 = scalar_lea.vmem %s2, 4
    %v1104 = vld [vmem:[%s1103] sm:$0x3]
    %v1105 = vxor.u32 %v1102, 2147483648
    %v1106 = vmul.f32 %v1105, 1.442695
    %v1107 = vpow.pop %v1106
    %v1108 = vadd.f32 %v1107, 1.0
    %v1109 = vrcp.pop %v1108
    %v1110 = vmul.f32 1.0, %v1109
    %v1111 = vtanh.pop %v1102
    %1113 = vrot.lane.b32.xlu0 %v1104, 32
    %v1114 = vpop.permute.xlu0 %1113
    %v1116 = vmul.f32 %v1110, %v1114
    %1118 = vrot.lane.b32.xlu0 %v1111, 64
    %v1119 = vpop.permute.xlu0 %1118
    %v1121 = vmul.f32 %v1110, %v1119
    %1123 = vrot.lane.b32.xlu0 %v1121, 32
    %v1124 = vpop.permute.xlu0 %1123
    %v1126 = vadd.f32 %v1116, %v1124
    %v1127 = vtanh.pop %v1126
    %1129 = vrot.lane.b32.xlu0 %v1127, 64
    %v1130 = vpop.permute.xlu0 %1129
    %v1132 = vmul.f32 %v1110, %v1130
    %v1133 = vld [vmem:[%s18] sm:$0xff]
    %v1134 = vld [vmem:[%s18 + $0x8] sm:$0xff]
    %v1135 = vld [vmem:[%s18 + $0x10] sm:$0xff]
    %v1136 = vld [vmem:[%s18 + $0x18] sm:$0xff]
    %v1137 = vld [vmem:[%s19] sm:$0xff]
    %v1138 = vld [vmem:[%s19 + $0x8] sm:$0xff]
    %v1139 = vld [vmem:[%s19 + $0x10] sm:$0xff]
    %v1140 = vld [vmem:[%s19 + $0x18] sm:$0xff]
    %1141 = vmatprep.subr.mxu0 0.0
    %1142 = vmatpush1.msra.mxu0 %v1137
    %1143 = vmatprep.subr.mxu0 0.0
    %1144 = vmatpush1.msra.mxu0 %v1138
    %1145 = vmatprep.subr.mxu0 0.0
    %1146 = vmatpush1.msra.mxu0 %v1139
    %1147 = vmatprep.subr.mxu0 0.0
    %1148 = vmatpush1.msra.mxu0 %v1140
    %1149 = vmatprep.subr.mxu0 0.0
    %1150 = vmatpush1.msra.mxu0 0.0
    %1151 = vmatprep.subr.mxu0 0.0
    %1152 = vmatpush1.msra.mxu0 0.0
    %1153 = vmatprep.subr.mxu0 0.0
    %1154 = vmatpush1.msra.mxu0 0.0
    %1155 = vmatprep.subr.mxu0 0.0
    %1156 = vmatpush1.msra.mxu0 0.0
    %1157 = vmatprep.subr.mxu0 0.0
    %1158 = vmatpush1.msra.mxu0 0.0
    %1159 = vmatprep.subr.mxu0 0.0
    %1160 = vmatpush1.msra.mxu0 0.0
    %1161 = vmatprep.subr.mxu0 0.0
    %1162 = vmatpush1.msra.mxu0 0.0
    %1163 = vmatprep.subr.mxu0 0.0
    %1164 = vmatpush1.msra.mxu0 0.0
    %1165 = vmatprep.subr.mxu0 0.0
    %1166 = vmatpush1.msra.mxu0 0.0
    %1167 = vmatprep.subr.mxu0 0.0
    %1168 = vmatpush1.msra.mxu0 0.0
    %1169 = vmatprep.subr.mxu0 0.0
    %1170 = vmatpush1.msra.mxu0 0.0
    %1171 = vmatprep.subr.mxu0 0.0
    %1172 = vmatpush1.msra.mxu0 0.0
    %1173 = vmatprep.subr.mxu0 0.0
    %1174 = vmatpush1.msra.mxu0 0.0
    %1175 = vmatprep.subr.mxu0 0.0
    %1176 = vmatpush1.msra.mxu0 0.0
    %1177 = vmatprep.subr.mxu0 0.0
    %1178 = vmatpush1.msra.mxu0 0.0
    %1179 = vmatprep.subr.mxu0 0.0
    %1180 = vmatpush1.msra.mxu0 0.0
    %1181 = vmatprep.subr.mxu0 0.0
    %1182 = vmatpush1.msra.mxu0 0.0
    %1183 = vmatprep.subr.mxu0 0.0
    %1184 = vmatpush1.msra.mxu0 0.0
    %1185 = vmatprep.subr.mxu0 0.0
    %1186 = vmatpush1.msra.mxu0 0.0
    %1187 = vmatprep.subr.mxu0 0.0
    %1188 = vmatpush1.msra.mxu0 0.0
    %1189 = vmatprep.subr.mxu0 0.0
    %1190 = vmatpush1.msra.mxu0 0.0
    %1191 = vmatprep.subr.mxu0 0.0
    %1192 = vmatpush1.msra.mxu0 0.0
    %1193 = vmatprep.subr.mxu0 0.0
    %1194 = vmatpush1.msra.mxu0 0.0
    %1195 = vmatprep.subr.mxu0 0.0
    %1196 = vmatpush1.msra.mxu0 0.0
    %1197 = vmatprep.subr.mxu0 0.0
    %1198 = vmatpush1.msra.mxu0 0.0
    %1199 = vmatprep.subr.mxu0 0.0
    %1200 = vmatpush1.msra.mxu0 0.0
    %1201 = vmatprep.subr.mxu0 0.0
    %1202 = vmatpush1.msra.mxu0 0.0
    %1203 = vmatprep.subr.mxu0 0.0
    %1204 = vmatpush1.msra.mxu0 0.0
    %1205 = vmatprep.mubr.f32.mxu0 0.0
    %1206 = vmatmul.mubr.f32.gmra.mrb[0].mxu0 %v622
    %v1207 = vpop.f32.mrb[0].mxu0
    %v1208 = vadd.f32 0.0, %v1207
    %v1209 = vpop.f32.mrb[0].mxu0
    %1210 = vdwg.mxu0
    %1212 = vrot.lane.b32.xlu0 %v1132, 32
    %v1213 = vpop.permute.xlu0 %1212
    %v1214 = vsel %vm220, %v1213, 0
    %1216 = vmatprep.subr.mxu0 0.0
    %1217 = vmatpush1.msra.mxu0 %v1133
    %1218 = vmatprep.subr.mxu0 0.0
    %1219 = vmatpush1.msra.mxu0 %v1134
    %1220 = vmatprep.subr.mxu0 0.0
    %1221 = vmatpush1.msra.mxu0 %v1135
    %1222 = vmatprep.subr.mxu0 0.0
    %1223 = vmatpush1.msra.mxu0 %v1136
    %1224 = vmatprep.subr.mxu0 0.0
    %1225 = vmatpush1.msra.mxu0 0.0
    %1226 = vmatprep.subr.mxu0 0.0
    %1227 = vmatpush1.msra.mxu0 0.0
    %1228 = vmatprep.subr.mxu0 0.0
    %1229 = vmatpush1.msra.mxu0 0.0
    %1230 = vmatprep.subr.mxu0 0.0
    %1231 = vmatpush1.msra.mxu0 0.0
    %1232 = vmatprep.subr.mxu0 0.0
    %1233 = vmatpush1.msra.mxu0 0.0
    %1234 = vmatprep.subr.mxu0 0.0
    %1235 = vmatpush1.msra.mxu0 0.0
    %1236 = vmatprep.subr.mxu0 0.0
    %1237 = vmatpush1.msra.mxu0 0.0
    %1238 = vmatprep.subr.mxu0 0.0
    %1239 = vmatpush1.msra.mxu0 0.0
    %1240 = vmatprep.subr.mxu0 0.0
    %1241 = vmatpush1.msra.mxu0 0.0
    %1242 = vmatprep.subr.mxu0 0.0
    %1243 = vmatpush1.msra.mxu0 0.0
    %1244 = vmatprep.subr.mxu0 0.0
    %1245 = vmatpush1.msra.mxu0 0.0
    %1246 = vmatprep.subr.mxu0 0.0
    %1247 = vmatpush1.msra.mxu0 0.0
    %1248 = vmatprep.subr.mxu0 0.0
    %1249 = vmatpush1.msra.mxu0 0.0
    %1250 = vmatprep.subr.mxu0 0.0
    %1251 = vmatpush1.msra.mxu0 0.0
    %1252 = vmatprep.subr.mxu0 0.0
    %1253 = vmatpush1.msra.mxu0 0.0
    %1254 = vmatprep.subr.mxu0 0.0
    %1255 = vmatpush1.msra.mxu0 0.0
    %1256 = vmatprep.subr.mxu0 0.0
    %1257 = vmatpush1.msra.mxu0 0.0
    %1258 = vmatprep.subr.mxu0 0.0
    %1259 = vmatpush1.msra.mxu0 0.0
    %1260 = vmatprep.subr.mxu0 0.0
    %1261 = vmatpush1.msra.mxu0 0.0
    %1262 = vmatprep.subr.mxu0 0.0
    %1263 = vmatpush1.msra.mxu0 0.0
    %1264 = vmatprep.subr.mxu0 0.0
    %1265 = vmatpush1.msra.mxu0 0.0
    %1266 = vmatprep.subr.mxu0 0.0
    %1267 = vmatpush1.msra.mxu0 0.0
    %1268 = vmatprep.subr.mxu0 0.0
    %1269 = vmatpush1.msra.mxu0 0.0
    %1270 = vmatprep.subr.mxu0 0.0
    %1271 = vmatpush1.msra.mxu0 0.0
    %1272 = vmatprep.subr.mxu0 0.0
    %1273 = vmatpush1.msra.mxu0 0.0
    %1274 = vmatprep.subr.mxu0 0.0
    %1275 = vmatpush1.msra.mxu0 0.0
    %1276 = vmatprep.subr.mxu0 0.0
    %1277 = vmatpush1.msra.mxu0 0.0
    %1278 = vmatprep.subr.mxu0 0.0
    %1279 = vmatpush1.msra.mxu0 0.0
    %1280 = vmatprep.mubr.f32.mxu0 0.0
    %1281 = vmatmul.mubr.f32.gmra.mrb[0].mxu0 %v1214
    %v1282 = vpop.f32.mrb[0].mxu0
    %v1283 = vadd.f32 %v1208, %v1282
    %v1284 = vpop.f32.mrb[0].mxu0
    %1285 = vdwg.mxu0
    %v1286 = vld [vmem:[#allocation2] sm:$0x1]
    %v1288 = vlaneseq
    %v1289 = vshrl.u32 %v1288, 7
    %v1290 = vsub.s32 0, %v1289
    %v1291 = vrot.slane %v1286, %v1290
    %v1293 = vadd.f32 %v1283, %v1291
    %vm1294 = vcmask 1024
    %1295 = vst.msk [vmem:[%s21] sm:$0x3] %vm1294, %v1293
    %vm1297 = vcmask 254976
    %1298 = vst.msk [vmem:[#allocation21] sm:$0x3] %vm1297, %v831
    %s1300 = scalar_lea.vmem [#allocation21], 2
    %1301 = vst.msk [vmem:[%s1300] sm:$0x3] %vm1297, %v1022
    %s1303 = scalar_lea.vmem [#allocation21], 4
    %1304 = vst.msk [vmem:[%s1303] sm:$0x3] %vm1297, %v1213
    %1306 = vrot.lane.b32.xlu0 %v739, 96
    %v1307 = vpop.permute.xlu0 %1306
    %1309 = vst.msk [vmem:[#allocation22] sm:$0x3] %vm1297, %v1307
    %1311 = vrot.lane.b32.xlu0 %v935, 96
    %v1312 = vpop.permute.xlu0 %1311
    %s1314 = scalar_lea.vmem [#allocation22], 2
    %1315 = vst.msk [vmem:[%s1314] sm:$0x3] %vm1297, %v1312
    %1317 = vrot.lane.b32.xlu0 %v1126, 96
    %v1318 = vpop.permute.xlu0 %1317
    %s1320 = scalar_lea.vmem [#allocation22], 4
    %1321 = vst.msk [vmem:[%s1320] sm:$0x3] %vm1297, %v1318
    // Predicated region
    $region130: #{attention_decoder_forward.1} parent=1 // pred_check
      _
    $region131: #{attention_decoder_forward.1} parent=1 // pred_check_branch
      %1323 = sbr.rel (0) target = $region133
    $region132: #{attention_decoder_forward.1} parent=1 // pred_region
      _
    $region133: #{attention_decoder_forward.1} parent=1 // pred_fallthru
      _
    // Predicated region
    $region134: #{attention_decoder_forward.1} parent=1 // pred_check
      _
    $region135: #{attention_decoder_forward.1} parent=1 // pred_check_branch
      %1325 = sbr.rel (0) target = $region137
    $region136: #{attention_decoder_forward.1} parent=1 // pred_region
      %s1327 = ssub.s32 96, 96
      %1328 = vsyncadd [#allocation5], %s1327
      %s1329 = sshll.u32 [#allocation21], 4
      %s1330 = int_to_ptr.vmem [resolvable:$true] %s1329
      %1335 = dma.vmem_to_hbm [thread:$0]  %s1330, 96, %s22, [#allocation5], 32, 32, 2
    $region137: #{attention_decoder_forward.1} parent=1 // pred_fallthru
      _
    // Predicated region
    $region138: #{attention_decoder_forward.1} parent=1 // pred_check
      _
    $region139: #{attention_decoder_forward.1} parent=1 // pred_check_branch
      %1337 = sbr.rel (0) target = $region141
    $region140: #{attention_decoder_forward.1} parent=1 // pred_region
      %s1339 = ssub.s32 96, 96
      %1340 = vsyncadd [#allocation23], %s1339
      %s1341 = sshll.u32 [#allocation22], 4
      %s1342 = int_to_ptr.vmem [resolvable:$true] %s1341
      %1347 = dma.vmem_to_hbm [thread:$0]  %s1342, 96, %s23, [#allocation23], 32, 32, 2
    $region141: #{attention_decoder_forward.1} parent=1 // pred_fallthru
      _
    // Predicated region
    $region142: #{attention_decoder_forward.1} parent=1 // pred_check
      _
    $region143: #{attention_decoder_forward.1} parent=1 // pred_check_branch
      %1349 = sbr.rel (0) target = $region145
    $region144: #{attention_decoder_forward.1} parent=1 // pred_region
      _
    $region145: #{attention_decoder_forward.1} parent=1 // pred_fallthru
      _
    // Predicated region
    $region146: #{attention_decoder_forward.1} parent=1 // pred_check
      _
    $region147: #{attention_decoder_forward.1} parent=1 // pred_check_branch
      %1351 = sbr.rel (0) target = $region149
    $region148: #{attention_decoder_forward.1} parent=1 // pred_region
      %1352 = dma.done [#allocation5], 96
    $region149: #{attention_decoder_forward.1} parent=1 // pred_fallthru
      _
    // Predicated region
    $region150: #{attention_decoder_forward.1} parent=1 // pred_check
      _
    $region151: #{attention_decoder_forward.1} parent=1 // pred_check_branch
      %1354 = sbr.rel (0) target = $region153
    $region152: #{attention_decoder_forward.1} parent=1 // pred_region
      %1355 = dma.done [#allocation23], 96
    $region153: #{attention_decoder_forward.1} parent=1 // pred_fallthru
      _
    %1356 = vsyncpa [#allocation4], 1
    %1357 = vsyncpa [#allocation7], 1
    %1358 = vsyncpa [#allocation10], 1
    %1359 = vsyncpa [#allocation13], 1
    %1360 = vsyncpa [#allocation16], 1
    %1361 = vsyncpa [#allocation19], 1
    %1362 = vsyncpa [#allocation5], 1
    %1363 = vsyncpa [#allocation23], 1

</llo_original>
